<compile_context>
chip_gen: v7x
topology: tpu7x:2x2x1
jax: 0.10.0
libtpu: 0.0.40
codegen_flags: <defaults>
</compile_context>

<pallas_src>
import math

import jax
import jax.numpy as jnp
from jax.experimental import pallas as pl
from jax.experimental.pallas import tpu as pltpu

# ----------------------------- model dimensions -----------------------------
B = 2               # batch
C_LAT = 4           # latent channels
H = W = 8           # latent spatial
HW = H * W          # tokens per sample
S_TXT = 8           # text sequence length
CROSS_DIM = 64      # cross-attention dim (== unet hidden here)
HIDDEN = 64         # unet hidden dim
EMBED_DIM = 32      # clip image-embed dim
NUM_IP_TOKENS = 4   # ip-adapter tokens
T_PAD = 8           # ip tokens padded to 8 per sample (sublane alignment)
S_KV = S_TXT + NUM_IP_TOKENS      # 12 real kv tokens per sample
SKV_PAD = S_TXT + T_PAD           # 16 kv rows per sample (4 padded, masked)
CIN_PAD = 8         # conv_in input channels padded 4 -> 8 (clean K=8 MXU pass)
LANES = 128         # slab lane width

# ----------------------- packed weight-slab row layout -----------------------
_ROW_SIZES = (
    ("w_ip", NUM_IP_TOKENS * EMBED_DIM),   # 128  blocked image-proj weight (T*E, D)
    ("b_ip", T_PAD),                       #   8  per-token image-proj bias (pad rows zero)
    ("ln_g", 1), ("ln_b", 1),              #      LayerNorm gamma / beta (1, D)
    ("w_t1", HIDDEN), ("b_t1", 1),         #      time-MLP layer 1
    ("w_t2", HIDDEN), ("b_t2", 1),         #      time-MLP layer 2
    ("w_ci", CIN_PAD), ("b_ci", 1),        #      conv_in 1x1 (padded to 8 in-rows)
    ("w_q", HIDDEN),                       #      attn scale pre-folded
    ("w_kv", CROSS_DIM),                   #      stacked K|V weights (D, 2*HIDDEN)
    ("w_o", HIDDEN),
    ("w_coT", C_LAT),                      #      conv_out weight, pre-transposed (C, HIDDEN)
    ("b_co", C_LAT),                       #      conv_out bias, pre-broadcast to (C, HW)
    ("mask", 1),                           #      additive softmax mask (1, SKV_PAD)
)
OFFS = {}
_off = 0
for _name, _n in _ROW_SIZES:
    OFFS[_name] = _off
    _off += _n
SLAB_ROWS = ((_off + 7) // 8) * 8


# ------------------------------ fused Pallas kernel --------------------------
def _fused_ip_adapter_kernel(
    x_ref,        # (B, HW, CIN_PAD)   latent tokens, channels-last, channel-padded
    txt_ref,      # (B, S_TXT, D)      text tokens
    temb_ref,     # (B, HIDDEN)        sinusoidal timestep embedding
    ieb_ref,      # (B, T_PAD, T*E)    block-diagonal replicated image embeds
    w_ref,        # (SLAB_ROWS, 128)   packed weight slab
    out_ref,      # (B, C_LAT, HW)     NCHW-ready noise prediction
):
    f32 = jnp.float32
    D, Hn = CROSS_DIM, HIDDEN

    def wv(name, rows, cols):              # static slab view -> VMEM load
        off = OFFS[name]
        return w_ref[off:off + rows, :cols]

    w_ip = wv("w_ip", NUM_IP_TOKENS * EMBED_DIM, D)
    b_ip = wv("b_ip", T_PAD, D)
    ln_g = wv("ln_g", 1, D)
    ln_b = wv("ln_b", 1, D)
    w_t1 = wv("w_t1", Hn, Hn)
    b_t1 = wv("b_t1", 1, Hn)
    w_t2 = wv("w_t2", Hn, Hn)
    b_t2 = wv("b_t2", 1, Hn)
    w_ci = wv("w_ci", CIN_PAD, Hn)
    b_ci = wv("b_ci", 1, Hn)
    w_q = wv("w_q", Hn, Hn)
    w_kv = wv("w_kv", D, 2 * Hn)
    w_o = wv("w_o", Hn, Hn)
    w_coT = wv("w_coT", C_LAT, Hn)
    b_co = wv("b_co", C_LAT, HW)
    mask = wv("mask", 1, SKV_PAD)

    # ---- time MLP for both samples at once: Linear -> SiLU -> Linear ----
    t = jnp.dot(temb_ref[...], w_t1, preferred_element_type=f32) + b_t1
    t = t * jax.nn.sigmoid(t)
    temb = jnp.dot(t, w_t2, preferred_element_type=f32) + b_t2         # (B, HIDDEN)

    # ---- per-sample stream: ip-proj, conv_in, cross-attn, conv_out, store ----
    for b in range(B):
        # image_proj_model: blocked Linear + per-token LayerNorm (f32 stats)
        ip = jnp.dot(ieb_ref[b], w_ip, preferred_element_type=f32) + b_ip   # (T_PAD, D)
        mu = jnp.mean(ip, axis=-1, keepdims=True)
        var = jnp.mean((ip - mu) * (ip - mu), axis=-1, keepdims=True)
        ip = (ip - mu) * jax.lax.rsqrt(var + 1e-5) * ln_g + ln_b
        # rows t >= NUM_IP_TOKENS are padding (masked via additive mask below)

        # conv_in (1x1) as one MXU dot + per-sample time-embedding broadcast add
        hid = jnp.dot(x_ref[b], w_ci, preferred_element_type=f32) + b_ci    # (HW, HIDDEN)
        hid = hid + temb[b:b + 1, :]

        # encoder states = [text ; ip tokens]; fused lane-dense K|V projection
        kv_src = jnp.concatenate([txt_ref[b], ip], axis=0)                  # (SKV_PAD, D)
        kv = jnp.dot(kv_src, w_kv, preferred_element_type=f32)              # (SKV_PAD, 2H)
        k = kv[:, :Hn]
        v = kv[:, Hn:]
        q = jnp.dot(hid, w_q, preferred_element_type=f32)                   # scale pre-folded

        # QK^T via last-axis contraction (no in-kernel k.T); additive pad mask
        s = jax.lax.dot_general(q, k, (((1,), (1,)), ((), ())),
                                preferred_element_type=f32) + mask          # (HW, SKV_PAD)
        m = jnp.max(s, axis=-1, keepdims=True)
        p = jnp.exp(s - m)
        p = p / jnp.sum(p, axis=-1, keepdims=True)                          # exact divide
        attn = jnp.dot(p, v, preferred_element_type=f32)                    # (HW, HIDDEN)

        # output projection + residual + conv_out emitted directly as (C, HW)
        hid = hid + jnp.dot(attn, w_o, preferred_element_type=f32)
        o = jax.lax.dot_general(w_coT, hid, (((1,), (1,)), ((), ())),
                                preferred_element_type=f32) + b_co          # (C_LAT, HW)
        out_ref[b] = o.astype(out_ref.dtype)


# --------------------------------- glue (JAX) --------------------------------
def sinusoidal_timestep_embedding(t, dim):
    half = dim // 2
    freqs = jnp.exp(-math.log(10000.0) * jnp.arange(half, dtype=jnp.float32) / half)
    args = t.astype(jnp.float32)[:, None] * freqs[None, :]
    return jnp.concatenate([jnp.cos(args), jnp.sin(args)], axis=-1)  # (B, dim)


def init_params(key):
    ks = jax.random.split(key, 12)

    def w(k, shape, scale=0.05):
        return (scale * jax.random.normal(k, shape)).astype(jnp.float32)

    return {
        # image_proj_model: Linear(EMBED_DIM, NUM_IP_TOKENS*CROSS_DIM) + LayerNorm(CROSS_DIM)
        "w_ip": w(ks[0], (EMBED_DIM, NUM_IP_TOKENS * CROSS_DIM)),
        "b_ip": jnp.zeros((NUM_IP_TOKENS * CROSS_DIM,), jnp.float32),
        "ln_g": jnp.ones((CROSS_DIM,), jnp.float32),
        "ln_b": jnp.zeros((CROSS_DIM,), jnp.float32),
        # time MLP
        "w_t1": w(ks[1], (HIDDEN, HIDDEN)), "b_t1": jnp.zeros((HIDDEN,), jnp.float32),
        "w_t2": w(ks[2], (HIDDEN, HIDDEN)), "b_t2": jnp.zeros((HIDDEN,), jnp.float32),
        # conv_in / conv_out (1x1 convs == per-pixel linear)
        "w_ci": w(ks[3], (C_LAT, HIDDEN)), "b_ci": jnp.zeros((HIDDEN,), jnp.float32),
        "w_co": w(ks[4], (HIDDEN, C_LAT)), "b_co": jnp.zeros((C_LAT,), jnp.float32),
        # cross-attention projections (no bias)
        "w_q": w(ks[5], (HIDDEN, HIDDEN)),
        "w_k": w(ks[6], (CROSS_DIM, HIDDEN)),
        "w_v": w(ks[7], (CROSS_DIM, HIDDEN)),
        "w_o": w(ks[8], (HIDDEN, HIDDEN)),
    }


def prepare_params(p):
    """One-time packing of all weights/biases into a single (SLAB_ROWS, 128) f32 slab."""
    # image-proj weight rearranged so a per-sample (T_PAD, T*E) @ (T*E, D) matmul
    # directly produces (token, D) rows.
    w_ip_blk = p["w_ip"].reshape(EMBED_DIM, NUM_IP_TOKENS, CROSS_DIM)
    w_ip_blk = jnp.transpose(w_ip_blk, (1, 0, 2)).reshape(
        NUM_IP_TOKENS * EMBED_DIM, CROSS_DIM)
    b_ip_pad = jnp.concatenate(
        [p["b_ip"].reshape(NUM_IP_TOKENS, CROSS_DIM),
         jnp.zeros((T_PAD - NUM_IP_TOKENS, CROSS_DIM), jnp.float32)], axis=0)
    w_ci_pad = jnp.concatenate(
        [p["w_ci"], jnp.zeros((CIN_PAD - C_LAT, HIDDEN), jnp.float32)], axis=0)
    w_kv = jnp.concatenate([p["w_k"], p["w_v"]], axis=1)               # (D, 2*HIDDEN)
    w_q_s = p["w_q"] * jnp.float32(1.0 / math.sqrt(HIDDEN))            # scale folded in
    w_coT = p["w_co"].T                                                # (C_LAT, HIDDEN)
    b_co_full = jnp.broadcast_to(p["b_co"][:, None], (C_LAT, HW))      # no in-kernel lane bcast
    mask = jnp.where(jnp.arange(SKV_PAD) < S_KV, 0.0, -1e30).astype(jnp.float32)[None, :]

    entries = [
        ("w_ip", w_ip_blk), ("b_ip", b_ip_pad),
        ("ln_g", p["ln_g"][None, :]), ("ln_b", p["ln_b"][None, :]),
        ("w_t1", p["w_t1"]), ("b_t1", p["b_t1"][None, :]),
        ("w_t2", p["w_t2"]), ("b_t2", p["b_t2"][None, :]),
        ("w_ci", w_ci_pad), ("b_ci", p["b_ci"][None, :]),
        ("w_q", w_q_s), ("w_kv", w_kv), ("w_o", p["w_o"]),
        ("w_coT", w_coT), ("b_co", b_co_full), ("mask", mask),
    ]
    slab = jnp.zeros((SLAB_ROWS, LANES), jnp.float32)
    for name, mat in entries:
        r, c = mat.shape
        slab = slab.at[OFFS[name]:OFFS[name] + r, :c].set(mat.astype(jnp.float32))
    return slab


def _full_block(shape):
    nd = len(shape)
    return pl.BlockSpec(shape, lambda i, _nd=nd: (0,) * _nd)


def my_ip_adapter_forward(wslab, noisy_latents, timesteps, encoder_hidden_states,
                          image_embeds):
    b, c, h, w = noisy_latents.shape
    hw = h * w

    # ---- cheap activation-side layout prep (fuses into one small XLA fusion) ----
    x = jnp.transpose(noisy_latents, (0, 2, 3, 1)).reshape(b, hw, c)     # (B, HW, C)
    x = jnp.pad(x, ((0, 0), (0, 0), (0, CIN_PAD - c)))                   # channel 4 -> 8
    txt = encoder_hidden_states                                          # (B, S_TXT, D) as-is
    temb_sin = sinusoidal_timestep_embedding(timesteps, HIDDEN)          # (B, HIDDEN)

    # block-diagonal replication of image_embeds so the blocked image-proj matmul
    # yields token-major rows without any in-kernel lane<->sublane reshape
    eye_t = jnp.eye(NUM_IP_TOKENS, dtype=jnp.float32)
    ie = image_embeds[:, None, None, :] * eye_t[None, :, :, None]        # (B,T,T,E)
    ie = ie.reshape(b, NUM_IP_TOKENS, NUM_IP_TOKENS * EMBED_DIM)
    ie = jnp.pad(ie, ((0, 0), (0, T_PAD - NUM_IP_TOKENS), (0, 0)))       # (B, T_PAD, T*E)

    args = (x, txt, temb_sin, ie, wslab)

    # grid=(1,): whole forward in one invocation (working set << VMEM on all gens).
    # On v7x one could use grid=(B,) + dimension_semantics=("parallel",) with
    # per-sample index_maps to shard the batch over the 2 TensorCores.
    out = pl.pallas_call(
        _fused_ip_adapter_kernel,
        out_shape=jax.ShapeDtypeStruct((b, c, hw), jnp.float32),
        grid=(1,),
        in_specs=[_full_block(a.shape) for a in args],
        out_specs=pl.BlockSpec((b, c, hw), lambda i: (0, 0, 0)),
        compiler_params=pltpu.CompilerParams(dimension_semantics=("arbitrary",)),
    )(*args)

    return out.reshape(b, c, h, w)            # metadata-only reshape back to NCHW


if __name__ == "__main__":
    key = jax.random.PRNGKey(0)
    k_par, k_lat, k_txt, k_img = jax.random.split(key, 4)

    params = init_params(k_par)
    wslab = prepare_params(params)

    noisy_latents = jax.random.normal(k_lat, (B, C_LAT, H, W), dtype=jnp.float32)
    timesteps = jnp.array([10.0, 500.0], dtype=jnp.float32)
    encoder_hidden_states = jax.random.normal(k_txt, (B, S_TXT, CROSS_DIM),
                                              dtype=jnp.float32)
    image_embeds = jax.random.normal(k_img, (B, EMBED_DIM), dtype=jnp.float32)

    fwd = jax.jit(my_ip_adapter_forward)
    noise_pred = fwd(wslab, noisy_latents, timesteps, encoder_hidden_states,
                     image_embeds)
    jax.block_until_ready(noise_pred)
    assert noise_pred.shape == (B, C_LAT, H, W)
    assert jnp.all(jnp.isfinite(noise_pred))
    print("KERNEL_OK")
</pallas_src>

<mosaic_0001>
module attributes {stable_mosaic.version = 11 : i64} {
  func.func @_fused_ip_adapter_kernel(%arg0: i32, %arg1: memref<2x64x8xf32, #tpu.memory_space<vmem>>, %arg2: memref<2x8x64xf32, #tpu.memory_space<vmem>>, %arg3: memref<2x64xf32, #tpu.memory_space<vmem>>, %arg4: memref<2x8x128xf32, #tpu.memory_space<vmem>>, %arg5: memref<480x128xf32, #tpu.memory_space<vmem>>, %arg6: memref<2x4x64xf32, #tpu.memory_space<vmem>>) attributes {dimension_semantics = [#tpu.dimension_semantics<arbitrary>], iteration_bounds = array<i64: 1>, scalar_prefetch = 0 : i64, scratch_operands = 0 : i64, tpu.core_type = #tpu.core_type<tc>, window_params = [{pipeline_mode = #tpu.pipeline_mode<synchronous>, transform_indices = @transform_0, window_bounds = array<i64: 2, 64, 8>}, {pipeline_mode = #tpu.pipeline_mode<synchronous>, transform_indices = @transform_1, window_bounds = array<i64: 2, 8, 64>}, {pipeline_mode = #tpu.pipeline_mode<synchronous>, transform_indices = @transform_2, window_bounds = array<i64: 2, 64>}, {pipeline_mode = #tpu.pipeline_mode<synchronous>, transform_indices = @transform_3, window_bounds = array<i64: 2, 8, 128>}, {pipeline_mode = #tpu.pipeline_mode<synchronous>, transform_indices = @transform_4, window_bounds = array<i64: 480, 128>}, {pipeline_mode = #tpu.pipeline_mode<synchronous>, transform_indices = @transform_5, window_bounds = array<i64: 2, 4, 64>}]} {
    %c0 = arith.constant 0 : index
    %c0_0 = arith.constant 0 : index
    %0 = vector.load %arg5[%c0, %c0_0] : memref<480x128xf32, #tpu.memory_space<vmem>>, vector<128x64xf32>
    %c128 = arith.constant 128 : index
    %c0_1 = arith.constant 0 : index
    %1 = vector.load %arg5[%c128, %c0_1] : memref<480x128xf32, #tpu.memory_space<vmem>>, vector<8x64xf32>
    %c136 = arith.constant 136 : index
    %c0_2 = arith.constant 0 : index
    %2 = vector.load %arg5[%c136, %c0_2] : memref<480x128xf32, #tpu.memory_space<vmem>>, vector<1x64xf32>
    %c137 = arith.constant 137 : index
    %c0_3 = arith.constant 0 : index
    %3 = vector.load %arg5[%c137, %c0_3] : memref<480x128xf32, #tpu.memory_space<vmem>>, vector<1x64xf32>
    %c138 = arith.constant 138 : index
    %c0_4 = arith.constant 0 : index
    %4 = vector.load %arg5[%c138, %c0_4] : memref<480x128xf32, #tpu.memory_space<vmem>>, vector<64x64xf32>
    %c202 = arith.constant 202 : index
    %c0_5 = arith.constant 0 : index
    %5 = vector.load %arg5[%c202, %c0_5] : memref<480x128xf32, #tpu.memory_space<vmem>>, vector<1x64xf32>
    %c203 = arith.constant 203 : index
    %c0_6 = arith.constant 0 : index
    %6 = vector.load %arg5[%c203, %c0_6] : memref<480x128xf32, #tpu.memory_space<vmem>>, vector<64x64xf32>
    %c267 = arith.constant 267 : index
    %c0_7 = arith.constant 0 : index
    %7 = vector.load %arg5[%c267, %c0_7] : memref<480x128xf32, #tpu.memory_space<vmem>>, vector<1x64xf32>
    %c268 = arith.constant 268 : index
    %c0_8 = arith.constant 0 : index
    %8 = vector.load %arg5[%c268, %c0_8] : memref<480x128xf32, #tpu.memory_space<vmem>>, vector<8x64xf32>
    %c276 = arith.constant 276 : index
    %c0_9 = arith.constant 0 : index
    %9 = vector.load %arg5[%c276, %c0_9] : memref<480x128xf32, #tpu.memory_space<vmem>>, vector<1x64xf32>
    %c277 = arith.constant 277 : index
    %c0_10 = arith.constant 0 : index
    %10 = vector.load %arg5[%c277, %c0_10] : memref<480x128xf32, #tpu.memory_space<vmem>>, vector<64x64xf32>
    %c341 = arith.constant 341 : index
    %c0_11 = arith.constant 0 : index
    %11 = vector.load %arg5[%c341, %c0_11] : memref<480x128xf32, #tpu.memory_space<vmem>>, vector<64x128xf32>
    %c405 = arith.constant 405 : index
    %c0_12 = arith.constant 0 : index
    %12 = vector.load %arg5[%c405, %c0_12] : memref<480x128xf32, #tpu.memory_space<vmem>>, vector<64x64xf32>
    %c469 = arith.constant 469 : index
    %c0_13 = arith.constant 0 : index
    %13 = vector.load %arg5[%c469, %c0_13] : memref<480x128xf32, #tpu.memory_space<vmem>>, vector<4x64xf32>
    %c473 = arith.constant 473 : index
    %c0_14 = arith.constant 0 : index
    %14 = vector.load %arg5[%c473, %c0_14] : memref<480x128xf32, #tpu.memory_space<vmem>>, vector<4x64xf32>
    %c477 = arith.constant 477 : index
    %c0_15 = arith.constant 0 : index
    %15 = vector.load %arg5[%c477, %c0_15] : memref<480x128xf32, #tpu.memory_space<vmem>>, vector<1x16xf32>
    %c0_16 = arith.constant 0 : index
    %c0_17 = arith.constant 0 : index
    %16 = vector.load %arg3[%c0_16, %c0_17] : memref<2x64xf32, #tpu.memory_space<vmem>>, vector<2x64xf32>
    %cst = arith.constant dense<0.000000e+00> : vector<2x64xf32>
    %17 = tpu.matmul %16, %4, %cst {dimension_numbers = #tpu.dot_dimension_numbers<[1], [0], [0], [1], [0, 0, 1, 1], [], []>} : vector<2x64xf32>, vector<64x64xf32>, vector<2x64xf32> -> vector<2x64xf32>
    %18 = vector.broadcast %5 : vector<1x64xf32> to vector<2x64xf32>
    %19 = arith.addf %17, %18 : vector<2x64xf32>
    %20 = arith.negf %19 : vector<2x64xf32>
    %21 = math.exp %20 : vector<2x64xf32>
    %cst_18 = arith.constant 1.000000e+00 : f32
    %22 = vector.broadcast %cst_18 : f32 to vector<2x64xf32>
    %23 = arith.addf %22, %21 : vector<2x64xf32>
    %24 = arith.divf %22, %23 : vector<2x64xf32>
    %25 = arith.mulf %19, %24 : vector<2x64xf32>
    %cst_19 = arith.constant dense<0.000000e+00> : vector<2x64xf32>
    %26 = tpu.matmul %25, %6, %cst_19 {dimension_numbers = #tpu.dot_dimension_numbers<[1], [0], [0], [1], [0, 0, 1, 1], [], []>} : vector<2x64xf32>, vector<64x64xf32>, vector<2x64xf32> -> vector<2x64xf32>
    %27 = vector.broadcast %7 : vector<1x64xf32> to vector<2x64xf32>
    %28 = arith.addf %26, %27 : vector<2x64xf32>
    %c0_20 = arith.constant 0 : index
    %c0_21 = arith.constant 0 : index
    %c0_22 = arith.constant 0 : index
    %29 = vector.load %arg4[%c0_20, %c0_21, %c0_22] : memref<2x8x128xf32, #tpu.memory_space<vmem>>, vector<1x8x128xf32>
    %30 = vector.shape_cast %29 : vector<1x8x128xf32> to vector<8x128xf32>
    %cst_23 = arith.constant dense<0.000000e+00> : vector<8x64xf32>
    %31 = tpu.matmul %30, %0, %cst_23 {dimension_numbers = #tpu.dot_dimension_numbers<[1], [0], [0], [1], [0, 0, 1, 1], [], []>} : vector<8x128xf32>, vector<128x64xf32>, vector<8x64xf32> -> vector<8x64xf32>
    %32 = arith.addf %31, %1 : vector<8x64xf32>
    %cst_24 = arith.constant dense<0.000000e+00> : vector<8xf32>
    %33 = vector.multi_reduction <add>, %32, %cst_24 [1] : vector<8x64xf32> to vector<8xf32>
    %34 = vector.shape_cast %33 : vector<8xf32> to vector<8x1xf32>
    %cst_25 = arith.constant 6.400000e+01 : f32
    %35 = vector.broadcast %cst_25 : f32 to vector<8x1xf32>
    %36 = arith.divf %34, %35 : vector<8x1xf32>
    %37 = vector.broadcast %36 : vector<8x1xf32> to vector<8x64xf32>
    %38 = arith.subf %32, %37 : vector<8x64xf32>
    %39 = vector.broadcast %36 : vector<8x1xf32> to vector<8x64xf32>
    %40 = arith.subf %32, %39 : vector<8x64xf32>
    %41 = arith.mulf %38, %40 : vector<8x64xf32>
    %cst_26 = arith.constant dense<0.000000e+00> : vector<8xf32>
    %42 = vector.multi_reduction <add>, %41, %cst_26 [1] : vector<8x64xf32> to vector<8xf32>
    %43 = vector.shape_cast %42 : vector<8xf32> to vector<8x1xf32>
    %cst_27 = arith.constant 6.400000e+01 : f32
    %44 = vector.broadcast %cst_27 : f32 to vector<8x1xf32>
    %45 = arith.divf %43, %44 : vector<8x1xf32>
    %46 = vector.broadcast %36 : vector<8x1xf32> to vector<8x64xf32>
    %47 = arith.subf %32, %46 : vector<8x64xf32>
    %cst_28 = arith.constant 9.99999974E-6 : f32
    %48 = vector.broadcast %cst_28 : f32 to vector<8x1xf32>
    %49 = arith.addf %45, %48 : vector<8x1xf32>
    %50 = math.rsqrt %49 : vector<8x1xf32>
    %51 = vector.broadcast %50 : vector<8x1xf32> to vector<8x64xf32>
    %52 = arith.mulf %47, %51 : vector<8x64xf32>
    %53 = vector.broadcast %2 : vector<1x64xf32> to vector<8x64xf32>
    %54 = arith.mulf %52, %53 : vector<8x64xf32>
    %55 = vector.broadcast %3 : vector<1x64xf32> to vector<8x64xf32>
    %56 = arith.addf %54, %55 : vector<8x64xf32>
    %c0_29 = arith.constant 0 : index
    %c0_30 = arith.constant 0 : index
    %c0_31 = arith.constant 0 : index
    %57 = vector.load %arg1[%c0_29, %c0_30, %c0_31] : memref<2x64x8xf32, #tpu.memory_space<vmem>>, vector<1x64x8xf32>
    %58 = vector.shape_cast %57 : vector<1x64x8xf32> to vector<64x8xf32>
    %cst_32 = arith.constant dense<0.000000e+00> : vector<64x64xf32>
    %59 = tpu.matmul %58, %8, %cst_32 {dimension_numbers = #tpu.dot_dimension_numbers<[1], [0], [0], [1], [0, 0, 1, 1], [], []>} : vector<64x8xf32>, vector<8x64xf32>, vector<64x64xf32> -> vector<64x64xf32>
    %60 = vector.broadcast %9 : vector<1x64xf32> to vector<64x64xf32>
    %61 = arith.addf %59, %60 : vector<64x64xf32>
    %62 = vector.extract_strided_slice %28 {offsets = [0, 0], sizes = [1, 64], strides = [1, 1]} : vector<2x64xf32> to vector<1x64xf32>
    %63 = vector.broadcast %62 : vector<1x64xf32> to vector<64x64xf32>
    %64 = arith.addf %61, %63 : vector<64x64xf32>
    %c0_33 = arith.constant 0 : index
    %c0_34 = arith.constant 0 : index
    %c0_35 = arith.constant 0 : index
    %65 = vector.load %arg2[%c0_33, %c0_34, %c0_35] : memref<2x8x64xf32, #tpu.memory_space<vmem>>, vector<1x8x64xf32>
    %66 = vector.shape_cast %65 : vector<1x8x64xf32> to vector<8x64xf32>
    %67 = tpu.concatenate %66, %56 in 0 : vector<8x64xf32>, vector<8x64xf32> -> vector<16x64xf32>
    %cst_36 = arith.constant dense<0.000000e+00> : vector<16x128xf32>
    %68 = tpu.matmul %67, %11, %cst_36 {dimension_numbers = #tpu.dot_dimension_numbers<[1], [0], [0], [1], [0, 0, 1, 1], [], []>} : vector<16x64xf32>, vector<64x128xf32>, vector<16x128xf32> -> vector<16x128xf32>
    %69 = vector.extract_strided_slice %68 {offsets = [0, 0], sizes = [16, 64], strides = [1, 1]} : vector<16x128xf32> to vector<16x64xf32>
    %70 = vector.extract_strided_slice %68 {offsets = [0, 64], sizes = [16, 64], strides = [1, 1]} : vector<16x128xf32> to vector<16x64xf32>
    %cst_37 = arith.constant dense<0.000000e+00> : vector<64x64xf32>
    %71 = tpu.matmul %64, %10, %cst_37 {dimension_numbers = #tpu.dot_dimension_numbers<[1], [0], [0], [1], [0, 0, 1, 1], [], []>} : vector<64x64xf32>, vector<64x64xf32>, vector<64x64xf32> -> vector<64x64xf32>
    %cst_38 = arith.constant dense<0.000000e+00> : vector<64x16xf32>
    %72 = tpu.matmul %71, %69, %cst_38 {dimension_numbers = #tpu.dot_dimension_numbers<[1], [1], [0], [0], [0, 0, 1, 0], [], []>} : vector<64x64xf32>, vector<16x64xf32>, vector<64x16xf32> -> vector<64x16xf32>
    %73 = vector.broadcast %15 : vector<1x16xf32> to vector<64x16xf32>
    %74 = arith.addf %72, %73 : vector<64x16xf32>
    %cst_39 = arith.constant dense<0xFF800000> : vector<64xf32>
    %75 = vector.multi_reduction <maximumf>, %74, %cst_39 [1] : vector<64x16xf32> to vector<64xf32>
    %76 = vector.shape_cast %75 : vector<64xf32> to vector<64x1xf32>
    %77 = vector.broadcast %76 : vector<64x1xf32> to vector<64x16xf32>
    %78 = arith.subf %74, %77 : vector<64x16xf32>
    %79 = math.exp %78 : vector<64x16xf32>
    %cst_40 = arith.constant dense<0.000000e+00> : vector<64xf32>
    %80 = vector.multi_reduction <add>, %79, %cst_40 [1] : vector<64x16xf32> to vector<64xf32>
    %81 = vector.shape_cast %80 : vector<64xf32> to vector<64x1xf32>
    %82 = vector.broadcast %81 : vector<64x1xf32> to vector<64x16xf32>
    %83 = arith.divf %79, %82 : vector<64x16xf32>
    %cst_41 = arith.constant dense<0.000000e+00> : vector<64x64xf32>
    %84 = tpu.matmul %83, %70, %cst_41 {dimension_numbers = #tpu.dot_dimension_numbers<[1], [0], [0], [1], [0, 0, 1, 1], [], []>} : vector<64x16xf32>, vector<16x64xf32>, vector<64x64xf32> -> vector<64x64xf32>
    %cst_42 = arith.constant dense<0.000000e+00> : vector<64x64xf32>
    %85 = tpu.matmul %84, %12, %cst_42 {dimension_numbers = #tpu.dot_dimension_numbers<[1], [0], [0], [1], [0, 0, 1, 1], [], []>} : vector<64x64xf32>, vector<64x64xf32>, vector<64x64xf32> -> vector<64x64xf32>
    %86 = arith.addf %64, %85 : vector<64x64xf32>
    %cst_43 = arith.constant dense<0.000000e+00> : vector<4x64xf32>
    %87 = tpu.matmul %13, %86, %cst_43 {dimension_numbers = #tpu.dot_dimension_numbers<[1], [1], [0], [0], [0, 0, 1, 0], [], []>} : vector<4x64xf32>, vector<64x64xf32>, vector<4x64xf32> -> vector<4x64xf32>
    %88 = arith.addf %87, %14 : vector<4x64xf32>
    %c0_44 = arith.constant 0 : index
    %c0_45 = arith.constant 0 : index
    %c0_46 = arith.constant 0 : index
    %89 = vector.load %arg6[%c0_44, %c0_45, %c0_46] : memref<2x4x64xf32, #tpu.memory_space<vmem>>, vector<1x4x64xf32>
    %90 = vector.shape_cast %89 : vector<1x4x64xf32> to vector<4x64xf32>
    %91 = vector.shape_cast %88 : vector<4x64xf32> to vector<1x4x64xf32>
    tpu.vector_store %arg6[%c0_44, %c0_45, %c0_46], %91 {strides = array<i32>} : memref<2x4x64xf32, #tpu.memory_space<vmem>>, vector<1x4x64xf32>,
    %c1 = arith.constant 1 : index
    %c0_47 = arith.constant 0 : index
    %c0_48 = arith.constant 0 : index
    %92 = vector.load %arg4[%c1, %c0_47, %c0_48] : memref<2x8x128xf32, #tpu.memory_space<vmem>>, vector<1x8x128xf32>
    %93 = vector.shape_cast %92 : vector<1x8x128xf32> to vector<8x128xf32>
    %cst_49 = arith.constant dense<0.000000e+00> : vector<8x64xf32>
    %94 = tpu.matmul %93, %0, %cst_49 {dimension_numbers = #tpu.dot_dimension_numbers<[1], [0], [0], [1], [0, 0, 1, 1], [], []>} : vector<8x128xf32>, vector<128x64xf32>, vector<8x64xf32> -> vector<8x64xf32>
    %95 = arith.addf %94, %1 : vector<8x64xf32>
    %cst_50 = arith.constant dense<0.000000e+00> : vector<8xf32>
    %96 = vector.multi_reduction <add>, %95, %cst_50 [1] : vector<8x64xf32> to vector<8xf32>
    %97 = vector.shape_cast %96 : vector<8xf32> to vector<8x1xf32>
    %cst_51 = arith.constant 6.400000e+01 : f32
    %98 = vector.broadcast %cst_51 : f32 to vector<8x1xf32>
    %99 = arith.divf %97, %98 : vector<8x1xf32>
    %100 = vector.broadcast %99 : vector<8x1xf32> to vector<8x64xf32>
    %101 = arith.subf %95, %100 : vector<8x64xf32>
    %102 = vector.broadcast %99 : vector<8x1xf32> to vector<8x64xf32>
    %103 = arith.subf %95, %102 : vector<8x64xf32>
    %104 = arith.mulf %101, %103 : vector<8x64xf32>
    %cst_52 = arith.constant dense<0.000000e+00> : vector<8xf32>
    %105 = vector.multi_reduction <add>, %104, %cst_52 [1] : vector<8x64xf32> to vector<8xf32>
    %106 = vector.shape_cast %105 : vector<8xf32> to vector<8x1xf32>
    %cst_53 = arith.constant 6.400000e+01 : f32
    %107 = vector.broadcast %cst_53 : f32 to vector<8x1xf32>
    %108 = arith.divf %106, %107 : vector<8x1xf32>
    %109 = vector.broadcast %99 : vector<8x1xf32> to vector<8x64xf32>
    %110 = arith.subf %95, %109 : vector<8x64xf32>
    %cst_54 = arith.constant 9.99999974E-6 : f32
    %111 = vector.broadcast %cst_54 : f32 to vector<8x1xf32>
    %112 = arith.addf %108, %111 : vector<8x1xf32>
    %113 = math.rsqrt %112 : vector<8x1xf32>
    %114 = vector.broadcast %113 : vector<8x1xf32> to vector<8x64xf32>
    %115 = arith.mulf %110, %114 : vector<8x64xf32>
    %116 = vector.broadcast %2 : vector<1x64xf32> to vector<8x64xf32>
    %117 = arith.mulf %115, %116 : vector<8x64xf32>
    %118 = vector.broadcast %3 : vector<1x64xf32> to vector<8x64xf32>
    %119 = arith.addf %117, %118 : vector<8x64xf32>
    %c1_55 = arith.constant 1 : index
    %c0_56 = arith.constant 0 : index
    %c0_57 = arith.constant 0 : index
    %120 = vector.load %arg1[%c1_55, %c0_56, %c0_57] : memref<2x64x8xf32, #tpu.memory_space<vmem>>, vector<1x64x8xf32>
    %121 = vector.shape_cast %120 : vector<1x64x8xf32> to vector<64x8xf32>
    %cst_58 = arith.constant dense<0.000000e+00> : vector<64x64xf32>
    %122 = tpu.matmul %121, %8, %cst_58 {dimension_numbers = #tpu.dot_dimension_numbers<[1], [0], [0], [1], [0, 0, 1, 1], [], []>} : vector<64x8xf32>, vector<8x64xf32>, vector<64x64xf32> -> vector<64x64xf32>
    %123 = vector.broadcast %9 : vector<1x64xf32> to vector<64x64xf32>
    %124 = arith.addf %122, %123 : vector<64x64xf32>
    %125 = vector.extract_strided_slice %28 {offsets = [1, 0], sizes = [1, 64], strides = [1, 1]} : vector<2x64xf32> to vector<1x64xf32>
    %126 = vector.broadcast %125 : vector<1x64xf32> to vector<64x64xf32>
    %127 = arith.addf %124, %126 : vector<64x64xf32>
    %c1_59 = arith.constant 1 : index
    %c0_60 = arith.constant 0 : index
    %c0_61 = arith.constant 0 : index
    %128 = vector.load %arg2[%c1_59, %c0_60, %c0_61] : memref<2x8x64xf32, #tpu.memory_space<vmem>>, vector<1x8x64xf32>
    %129 = vector.shape_cast %128 : vector<1x8x64xf32> to vector<8x64xf32>
    %130 = tpu.concatenate %129, %119 in 0 : vector<8x64xf32>, vector<8x64xf32> -> vector<16x64xf32>
    %cst_62 = arith.constant dense<0.000000e+00> : vector<16x128xf32>
    %131 = tpu.matmul %130, %11, %cst_62 {dimension_numbers = #tpu.dot_dimension_numbers<[1], [0], [0], [1], [0, 0, 1, 1], [], []>} : vector<16x64xf32>, vector<64x128xf32>, vector<16x128xf32> -> vector<16x128xf32>
    %132 = vector.extract_strided_slice %131 {offsets = [0, 0], sizes = [16, 64], strides = [1, 1]} : vector<16x128xf32> to vector<16x64xf32>
    %133 = vector.extract_strided_slice %131 {offsets = [0, 64], sizes = [16, 64], strides = [1, 1]} : vector<16x128xf32> to vector<16x64xf32>
    %cst_63 = arith.constant dense<0.000000e+00> : vector<64x64xf32>
    %134 = tpu.matmul %127, %10, %cst_63 {dimension_numbers = #tpu.dot_dimension_numbers<[1], [0], [0], [1], [0, 0, 1, 1], [], []>} : vector<64x64xf32>, vector<64x64xf32>, vector<64x64xf32> -> vector<64x64xf32>
    %cst_64 = arith.constant dense<0.000000e+00> : vector<64x16xf32>
    %135 = tpu.matmul %134, %132, %cst_64 {dimension_numbers = #tpu.dot_dimension_numbers<[1], [1], [0], [0], [0, 0, 1, 0], [], []>} : vector<64x64xf32>, vector<16x64xf32>, vector<64x16xf32> -> vector<64x16xf32>
    %136 = vector.broadcast %15 : vector<1x16xf32> to vector<64x16xf32>
    %137 = arith.addf %135, %136 : vector<64x16xf32>
    %cst_65 = arith.constant dense<0xFF800000> : vector<64xf32>
    %138 = vector.multi_reduction <maximumf>, %137, %cst_65 [1] : vector<64x16xf32> to vector<64xf32>
    %139 = vector.shape_cast %138 : vector<64xf32> to vector<64x1xf32>
    %140 = vector.broadcast %139 : vector<64x1xf32> to vector<64x16xf32>
    %141 = arith.subf %137, %140 : vector<64x16xf32>
    %142 = math.exp %141 : vector<64x16xf32>
    %cst_66 = arith.constant dense<0.000000e+00> : vector<64xf32>
    %143 = vector.multi_reduction <add>, %142, %cst_66 [1] : vector<64x16xf32> to vector<64xf32>
    %144 = vector.shape_cast %143 : vector<64xf32> to vector<64x1xf32>
    %145 = vector.broadcast %144 : vector<64x1xf32> to vector<64x16xf32>
    %146 = arith.divf %142, %145 : vector<64x16xf32>
    %cst_67 = arith.constant dense<0.000000e+00> : vector<64x64xf32>
    %147 = tpu.matmul %146, %133, %cst_67 {dimension_numbers = #tpu.dot_dimension_numbers<[1], [0], [0], [1], [0, 0, 1, 1], [], []>} : vector<64x16xf32>, vector<16x64xf32>, vector<64x64xf32> -> vector<64x64xf32>
    %cst_68 = arith.constant dense<0.000000e+00> : vector<64x64xf32>
    %148 = tpu.matmul %147, %12, %cst_68 {dimension_numbers = #tpu.dot_dimension_numbers<[1], [0], [0], [1], [0, 0, 1, 1], [], []>} : vector<64x64xf32>, vector<64x64xf32>, vector<64x64xf32> -> vector<64x64xf32>
    %149 = arith.addf %127, %148 : vector<64x64xf32>
    %cst_69 = arith.constant dense<0.000000e+00> : vector<4x64xf32>
    %150 = tpu.matmul %13, %149, %cst_69 {dimension_numbers = #tpu.dot_dimension_numbers<[1], [1], [0], [0], [0, 0, 1, 0], [], []>} : vector<4x64xf32>, vector<64x64xf32>, vector<4x64xf32> -> vector<4x64xf32>
    %151 = arith.addf %150, %14 : vector<4x64xf32>
    %c1_70 = arith.constant 1 : index
    %c0_71 = arith.constant 0 : index
    %c0_72 = arith.constant 0 : index
    %152 = vector.load %arg6[%c1_70, %c0_71, %c0_72] : memref<2x4x64xf32, #tpu.memory_space<vmem>>, vector<1x4x64xf32>
    %153 = vector.shape_cast %152 : vector<1x4x64xf32> to vector<4x64xf32>
    %154 = vector.shape_cast %151 : vector<4x64xf32> to vector<1x4x64xf32>
    tpu.vector_store %arg6[%c1_70, %c0_71, %c0_72], %154 {strides = array<i32>} : memref<2x4x64xf32, #tpu.memory_space<vmem>>, vector<1x4x64xf32>,
    return
  }
  func.func @transform_0(%arg0: i32) -> (i32, i32, i32) {
    %c0_i32 = arith.constant 0 : i32
    %c0_i32_0 = arith.constant 0 : i32
    %c0_i32_1 = arith.constant 0 : i32
    %c0_i32_2 = arith.constant 0 : i32
    return %c0_i32, %c0_i32_0, %c0_i32_1 : i32, i32, i32
  }
  func.func @transform_1(%arg0: i32) -> (i32, i32, i32) {
    %c0_i32 = arith.constant 0 : i32
    %c0_i32_0 = arith.constant 0 : i32
    %c0_i32_1 = arith.constant 0 : i32
    %c0_i32_2 = arith.constant 0 : i32
    return %c0_i32, %c0_i32_0, %c0_i32_1 : i32, i32, i32
  }
  func.func @transform_2(%arg0: i32) -> (i32, i32) {
    %c0_i32 = arith.constant 0 : i32
    %c0_i32_0 = arith.constant 0 : i32
    %c0_i32_1 = arith.constant 0 : i32
    return %c0_i32, %c0_i32_0 : i32, i32
  }
  func.func @transform_3(%arg0: i32) -> (i32, i32, i32) {
    %c0_i32 = arith.constant 0 : i32
    %c0_i32_0 = arith.constant 0 : i32
    %c0_i32_1 = arith.constant 0 : i32
    %c0_i32_2 = arith.constant 0 : i32
    return %c0_i32, %c0_i32_0, %c0_i32_1 : i32, i32, i32
  }
  func.func @transform_4(%arg0: i32) -> (i32, i32) {
    %c0_i32 = arith.constant 0 : i32
    %c0_i32_0 = arith.constant 0 : i32
    %c0_i32_1 = arith.constant 0 : i32
    return %c0_i32, %c0_i32_0 : i32, i32
  }
  func.func @transform_5(%arg0: i32) -> (i32, i32, i32) {
    %c0_i32 = arith.constant 0 : i32
    %c0_i32_0 = arith.constant 0 : i32
    %c0_i32_1 = arith.constant 0 : i32
    %c0_i32_2 = arith.constant 0 : i32
    return %c0_i32, %c0_i32_0, %c0_i32_1 : i32, i32, i32
  }
}

</mosaic_0001>

<llo_original>
// kernel: my_ip_adapter_forward.1
$region0: #{my_ip_adapter_forward.1}
  #allocation0 [shape = 'u32[]', space=smem, size = 0x4, offset = 0x4, fixed_abs, tag = 'smem constant byte address 0x4 - core index']
  #allocation1 [shape = 'u32[144,128]{1,0:T(1,128)}', space=vmem, size = 0x12000, scoped, tag = 'internal scratch']
  %s0 = inlined_call_operand.vmem [shape: f32[2,64,8], index: 0, kind: input, shape index: {}]
  %s1 = inlined_call_operand.vmem [shape: f32[2,8,64], index: 1, kind: input, shape index: {}]
  %s2 = inlined_call_operand.vmem [shape: f32[2,64], index: 2, kind: input, shape index: {}]
  %s3 = inlined_call_operand.vmem [shape: f32[2,8,128], index: 3, kind: input, shape index: {}]
  %s4 = inlined_call_operand.vmem [shape: f32[480,128], index: 4, kind: input, shape index: {}]
  %s5 = inlined_call_operand.vmem [shape: f32[2,4,64], index: 5, kind: output, shape index: {}]
  %s6 = sld [smem:[#allocation0]]
  $region30: #{my_ip_adapter_forward.1} parent=0
    _
  %s8 = ssub.s32 1, %s6
  %s9 = scalar_select 0, %s8, %s6
  // Predicated region
  $region2: #{my_ip_adapter_forward.1} parent=0 // pred_check
    _
  $region3: #{my_ip_adapter_forward.1} parent=0 // pred_check_branch
    %11 = sbr.rel (0) target = $region5
  $region4: #{my_ip_adapter_forward.1} parent=0 // pred_region
    _
  $region5: #{my_ip_adapter_forward.1} parent=0 // pred_fallthru
    _
  // Predicated region
  $region6: #{my_ip_adapter_forward.1} parent=0 // pred_check
    _
  $region7: #{my_ip_adapter_forward.1} parent=0 // pred_check_branch
    %13 = sbr.rel (0) target = $region9
  $region8: #{my_ip_adapter_forward.1} parent=0 // pred_region
    _
  $region9: #{my_ip_adapter_forward.1} parent=0 // pred_fallthru
    _
  // Predicated region
  $region10: #{my_ip_adapter_forward.1} parent=0 // pred_check
    _
  $region11: #{my_ip_adapter_forward.1} parent=0 // pred_check_branch
    %15 = sbr.rel (0) target = $region13
  $region12: #{my_ip_adapter_forward.1} parent=0 // pred_region
    _
  $region13: #{my_ip_adapter_forward.1} parent=0 // pred_fallthru
    _
  // Predicated region
  $region14: #{my_ip_adapter_forward.1} parent=0 // pred_check
    _
  $region15: #{my_ip_adapter_forward.1} parent=0 // pred_check_branch
    %17 = sbr.rel (0) target = $region17
  $region16: #{my_ip_adapter_forward.1} parent=0 // pred_region
    _
  $region17: #{my_ip_adapter_forward.1} parent=0 // pred_fallthru
    _
  // Predicated region
  $region18: #{my_ip_adapter_forward.1} parent=0 // pred_check
    _
  $region19: #{my_ip_adapter_forward.1} parent=0 // pred_check_branch
    %19 = sbr.rel (0) target = $region21
  $region20: #{my_ip_adapter_forward.1} parent=0 // pred_region
    _
  $region21: #{my_ip_adapter_forward.1} parent=0 // pred_fallthru
    _
  %v20 = vld [vmem:[%s4] sm:$0xff]
  %v21 = vld [vmem:[%s4 + $0x8] sm:$0xff]
  %v22 = vld [vmem:[%s4 + $0x10] sm:$0xff]
  %v23 = vld [vmem:[%s4 + $0x18] sm:$0xff]
  %v24 = vld [vmem:[%s4 + $0x20] sm:$0xff]
  %v25 = vld [vmem:[%s4 + $0x28] sm:$0xff]
  %v26 = vld [vmem:[%s4 + $0x30] sm:$0xff]
  %v27 = vld [vmem:[%s4 + $0x38] sm:$0xff]
  %v28 = vld [vmem:[%s4 + $0x40] sm:$0xff]
  %v29 = vld [vmem:[%s4 + $0x48] sm:$0xff]
  %v30 = vld [vmem:[%s4 + $0x50] sm:$0xff]
  %v31 = vld [vmem:[%s4 + $0x58] sm:$0xff]
  %v32 = vld [vmem:[%s4 + $0x60] sm:$0xff]
  %v33 = vld [vmem:[%s4 + $0x68] sm:$0xff]
  %v34 = vld [vmem:[%s4 + $0x70] sm:$0xff]
  %v35 = vld [vmem:[%s4 + $0x78] sm:$0xff]
  %v36 = vld [vmem:[%s4 + $0x80] sm:$0xff]
  %v37 = vld [vmem:[%s4 + $0x88] sm:$0x1]
  %v38 = vld [vmem:[%s4 + $0x89] sm:$0x1]
  %v39 = vld [vmem:[%s4 + $0x8a] sm:$0xff]
  %v40 = vld [vmem:[%s4 + $0x92] sm:$0xff]
  %v41 = vld [vmem:[%s4 + $0x9a] sm:$0xff]
  %v42 = vld [vmem:[%s4 + $0xa2] sm:$0xff]
  %v43 = vld [vmem:[%s4 + $0xaa] sm:$0xff]
  %v44 = vld [vmem:[%s4 + $0xb2] sm:$0xff]
  %v45 = vld [vmem:[%s4 + $0xba] sm:$0xff]
  %v46 = vld [vmem:[%s4 + $0xc2] sm:$0xff]
  %v47 = vld [vmem:[%s4 + $0xca] sm:$0x1]
  %v48 = vld [vmem:[%s4 + $0xcb] sm:$0xff]
  %v49 = vld [vmem:[%s4 + $0xd3] sm:$0xff]
  %v50 = vld [vmem:[%s4 + $0xdb] sm:$0xff]
  %v51 = vld [vmem:[%s4 + $0xe3] sm:$0xff]
  %v52 = vld [vmem:[%s4 + $0xeb] sm:$0xff]
  %v53 = vld [vmem:[%s4 + $0xf3] sm:$0xff]
  %v54 = vld [vmem:[%s4 + $0xfb] sm:$0xff]
  %v55 = vld [vmem:[%s4 + $0x103] sm:$0xff]
  %v56 = vld [vmem:[%s4 + $0x10b] sm:$0x1]
  %v57 = vld [vmem:[%s4 + $0x10c] sm:$0xff]
  %v58 = vld [vmem:[%s4 + $0x114] sm:$0x1]
  %v59 = vld [vmem:[%s4 + $0x115] sm:$0xff]
  %v60 = vld [vmem:[%s4 + $0x11d] sm:$0xff]
  %v61 = vld [vmem:[%s4 + $0x125] sm:$0xff]
  %v62 = vld [vmem:[%s4 + $0x12d] sm:$0xff]
  %v63 = vld [vmem:[%s4 + $0x135] sm:$0xff]
  %v64 = vld [vmem:[%s4 + $0x13d] sm:$0xff]
  %v65 = vld [vmem:[%s4 + $0x145] sm:$0xff]
  %v66 = vld [vmem:[%s4 + $0x14d] sm:$0xff]
  %v67 = vld [vmem:[%s4 + $0x155] sm:$0xff]
  %v68 = vld [vmem:[%s4 + $0x15d] sm:$0xff]
  %v69 = vld [vmem:[%s4 + $0x165] sm:$0xff]
  %v70 = vld [vmem:[%s4 + $0x16d] sm:$0xff]
  %v71 = vld [vmem:[%s4 + $0x175] sm:$0xff]
  %v72 = vld [vmem:[%s4 + $0x17d] sm:$0xff]
  %v73 = vld [vmem:[%s4 + $0x185] sm:$0xff]
  %v74 = vld [vmem:[%s4 + $0x18d] sm:$0xff]
  %v75 = vld [vmem:[%s4 + $0x195] sm:$0xff]
  %v76 = vld [vmem:[%s4 + $0x19d] sm:$0xff]
  %v77 = vld [vmem:[%s4 + $0x1a5] sm:$0xff]
  %v78 = vld [vmem:[%s4 + $0x1ad] sm:$0xff]
  %v79 = vld [vmem:[%s4 + $0x1b5] sm:$0xff]
  %v80 = vld [vmem:[%s4 + $0x1bd] sm:$0xff]
  %v81 = vld [vmem:[%s4 + $0x1c5] sm:$0xff]
  %v82 = vld [vmem:[%s4 + $0x1cd] sm:$0xff]
  %v83 = vld [vmem:[%s4 + $0x1d5] sm:$0xf]
  %v84 = vld [vmem:[%s4 + $0x1d9] sm:$0xf]
  %v85 = vld [vmem:[%s4 + $0x1dd] sm:$0x1]
  %v86 = vld [vmem:[%s2] sm:$0x3]
  %v87 = vlaneseq
  %v88 = vshrl.u32 %v87, 7
  %v89 = vsub.s32 0, %v88
  %v90 = vrot.slane %v47, %v89
  %vm91 = vcmask 523264
  %v93 = vsel %vm91, %v86, 0
  %95 = vmatprep.subr.mxu0 0.0
  %96 = vmatpush1.msra.mxu0 %v39
  %97 = vmatprep.subr.mxu0 0.0
  %98 = vmatpush1.msra.mxu0 %v40
  %99 = vmatprep.subr.mxu0 0.0
  %100 = vmatpush1.msra.mxu0 %v41
  %101 = vmatprep.subr.mxu0 0.0
  %102 = vmatpush1.msra.mxu0 %v42
  %103 = vmatprep.subr.mxu0 0.0
  %104 = vmatpush1.msra.mxu0 %v43
  %105 = vmatprep.subr.mxu0 0.0
  %106 = vmatpush1.msra.mxu0 %v44
  %107 = vmatprep.subr.mxu0 0.0
  %108 = vmatpush1.msra.mxu0 %v45
  %109 = vmatprep.subr.mxu0 0.0
  %110 = vmatpush1.msra.mxu0 %v46
  %111 = vmatprep.subr.mxu0 0.0
  %112 = vmatpush1.msra.mxu0 0.0
  %113 = vmatprep.subr.mxu0 0.0
  %114 = vmatpush1.msra.mxu0 0.0
  %115 = vmatprep.subr.mxu0 0.0
  %116 = vmatpush1.msra.mxu0 0.0
  %117 = vmatprep.subr.mxu0 0.0
  %118 = vmatpush1.msra.mxu0 0.0
  %119 = vmatprep.subr.mxu0 0.0
  %120 = vmatpush1.msra.mxu0 0.0
  %121 = vmatprep.subr.mxu0 0.0
  %122 = vmatpush1.msra.mxu0 0.0
  %123 = vmatprep.subr.mxu0 0.0
  %124 = vmatpush1.msra.mxu0 0.0
  %125 = vmatprep.subr.mxu0 0.0
  %126 = vmatpush1.msra.mxu0 0.0
  %127 = vmatprep.subr.mxu0 0.0
  %128 = vmatpush1.msra.mxu0 0.0
  %129 = vmatprep.subr.mxu0 0.0
  %130 = vmatpush1.msra.mxu0 0.0
  %131 = vmatprep.subr.mxu0 0.0
  %132 = vmatpush1.msra.mxu0 0.0
  %133 = vmatprep.subr.mxu0 0.0
  %134 = vmatpush1.msra.mxu0 0.0
  %135 = vmatprep.subr.mxu0 0.0
  %136 = vmatpush1.msra.mxu0 0.0
  %137 = vmatprep.subr.mxu0 0.0
  %138 = vmatpush1.msra.mxu0 0.0
  %139 = vmatprep.subr.mxu0 0.0
  %140 = vmatpush1.msra.mxu0 0.0
  %141 = vmatprep.subr.mxu0 0.0
  %142 = vmatpush1.msra.mxu0 0.0
  %143 = vmatprep.subr.mxu0 0.0
  %144 = vmatpush1.msra.mxu0 0.0
  %145 = vmatprep.subr.mxu0 0.0
  %146 = vmatpush1.msra.mxu0 0.0
  %147 = vmatprep.subr.mxu0 0.0
  %148 = vmatpush1.msra.mxu0 0.0
  %149 = vmatprep.subr.mxu0 0.0
  %150 = vmatpush1.msra.mxu0 0.0
  %151 = vmatprep.subr.mxu0 0.0
  %152 = vmatpush1.msra.mxu0 0.0
  %153 = vmatprep.subr.mxu0 0.0
  %154 = vmatpush1.msra.mxu0 0.0
  %155 = vmatprep.subr.mxu0 0.0
  %156 = vmatpush1.msra.mxu0 0.0
  %157 = vmatprep.subr.mxu0 0.0
  %158 = vmatpush1.msra.mxu0 0.0
  %159 = vmatprep.mubr.f32.mxu0 0.0
  %160 = vmatmul.mubr.f32.gmra.mrb[0].mxu0 %v93
  %v161 = vpop.f32.mrb[0].mxu0
  %v162 = vadd.f32 %v90, %v161
  %v163 = vpop.f32.mrb[0].mxu0
  %164 = vdwg.mxu0
  %v165 = vxor.u32 %v162, 2147483648
  %v166 = vmul.f32 %v165, 1.442695
  %v167 = vpow.pop %v166
  %v168 = vadd.f32 %v167, 1.0
  %v169 = vrcp.pop %v168
  %v170 = vmul.f32 1.0, %v169
  %v171 = vmul.f32 %v162, %v170
  %v172 = vlaneseq
  %v173 = vshrl.u32 %v172, 7
  %v174 = vsub.s32 0, %v173
  %v175 = vrot.slane %v56, %v174
  %v177 = vsel %vm91, %v171, 0
  %179 = vmatprep.subr.mxu0 0.0
  %180 = vmatpush1.msra.mxu0 %v48
  %181 = vmatprep.subr.mxu0 0.0
  %182 = vmatpush1.msra.mxu0 %v49
  %183 = vmatprep.subr.mxu0 0.0
  %184 = vmatpush1.msra.mxu0 %v50
  %185 = vmatprep.subr.mxu0 0.0
  %186 = vmatpush1.msra.mxu0 %v51
  %187 = vmatprep.subr.mxu0 0.0
  %188 = vmatpush1.msra.mxu0 %v52
  %189 = vmatprep.subr.mxu0 0.0
  %190 = vmatpush1.msra.mxu0 %v53
  %191 = vmatprep.subr.mxu0 0.0
  %192 = vmatpush1.msra.mxu0 %v54
  %193 = vmatprep.subr.mxu0 0.0
  %194 = vmatpush1.msra.mxu0 %v55
  %195 = vmatprep.subr.mxu0 0.0
  %196 = vmatpush1.msra.mxu0 0.0
  %197 = vmatprep.subr.mxu0 0.0
  %198 = vmatpush1.msra.mxu0 0.0
  %199 = vmatprep.subr.mxu0 0.0
  %200 = vmatpush1.msra.mxu0 0.0
  %201 = vmatprep.subr.mxu0 0.0
  %202 = vmatpush1.msra.mxu0 0.0
  %203 = vmatprep.subr.mxu0 0.0
  %204 = vmatpush1.msra.mxu0 0.0
  %205 = vmatprep.subr.mxu0 0.0
  %206 = vmatpush1.msra.mxu0 0.0
  %207 = vmatprep.subr.mxu0 0.0
  %208 = vmatpush1.msra.mxu0 0.0
  %209 = vmatprep.subr.mxu0 0.0
  %210 = vmatpush1.msra.mxu0 0.0
  %211 = vmatprep.subr.mxu0 0.0
  %212 = vmatpush1.msra.mxu0 0.0
  %213 = vmatprep.subr.mxu0 0.0
  %214 = vmatpush1.msra.mxu0 0.0
  %215 = vmatprep.subr.mxu0 0.0
  %216 = vmatpush1.msra.mxu0 0.0
  %217 = vmatprep.subr.mxu0 0.0
  %218 = vmatpush1.msra.mxu0 0.0
  %219 = vmatprep.subr.mxu0 0.0
  %220 = vmatpush1.msra.mxu0 0.0
  %221 = vmatprep.subr.mxu0 0.0
  %222 = vmatpush1.msra.mxu0 0.0
  %223 = vmatprep.subr.mxu0 0.0
  %224 = vmatpush1.msra.mxu0 0.0
  %225 = vmatprep.subr.mxu0 0.0
  %226 = vmatpush1.msra.mxu0 0.0
  %227 = vmatprep.subr.mxu0 0.0
  %228 = vmatpush1.msra.mxu0 0.0
  %229 = vmatprep.subr.mxu0 0.0
  %230 = vmatpush1.msra.mxu0 0.0
  %231 = vmatprep.subr.mxu0 0.0
  %232 = vmatpush1.msra.mxu0 0.0
  %233 = vmatprep.subr.mxu0 0.0
  %234 = vmatpush1.msra.mxu0 0.0
  %235 = vmatprep.subr.mxu0 0.0
  %236 = vmatpush1.msra.mxu0 0.0
  %237 = vmatprep.subr.mxu0 0.0
  %238 = vmatpush1.msra.mxu0 0.0
  %239 = vmatprep.subr.mxu0 0.0
  %240 = vmatpush1.msra.mxu0 0.0
  %241 = vmatprep.subr.mxu0 0.0
  %242 = vmatpush1.msra.mxu0 0.0
  %243 = vmatprep.mubr.f32.mxu0 0.0
  %244 = vmatmul.mubr.f32.gmra.mrb[0].mxu0 %v177
  %v245 = vpop.f32.mrb[0].mxu0
  %v246 = vadd.f32 %v175, %v245
  %v247 = vpop.f32.mrb[0].mxu0
  %248 = vdwg.mxu0
  %v249 = vld [vmem:[%s3] sm:$0xff]
  %250 = vmatprep.subr.mxu0 0.0
  %251 = vmatpush1.msra.mxu0 %v20
  %252 = vmatprep.subr.mxu0 0.0
  %253 = vmatpush1.msra.mxu0 %v21
  %254 = vmatprep.subr.mxu0 0.0
  %255 = vmatpush1.msra.mxu0 %v22
  %256 = vmatprep.subr.mxu0 0.0
  %257 = vmatpush1.msra.mxu0 %v23
  %258 = vmatprep.subr.mxu0 0.0
  %259 = vmatpush1.msra.mxu0 %v24
  %260 = vmatprep.subr.mxu0 0.0
  %261 = vmatpush1.msra.mxu0 %v25
  %262 = vmatprep.subr.mxu0 0.0
  %263 = vmatpush1.msra.mxu0 %v26
  %264 = vmatprep.subr.mxu0 0.0
  %265 = vmatpush1.msra.mxu0 %v27
  %266 = vmatprep.subr.mxu0 0.0
  %267 = vmatpush1.msra.mxu0 %v28
  %268 = vmatprep.subr.mxu0 0.0
  %269 = vmatpush1.msra.mxu0 %v29
  %270 = vmatprep.subr.mxu0 0.0
  %271 = vmatpush1.msra.mxu0 %v30
  %272 = vmatprep.subr.mxu0 0.0
  %273 = vmatpush1.msra.mxu0 %v31
  %274 = vmatprep.subr.mxu0 0.0
  %275 = vmatpush1.msra.mxu0 %v32
  %276 = vmatprep.subr.mxu0 0.0
  %277 = vmatpush1.msra.mxu0 %v33
  %278 = vmatprep.subr.mxu0 0.0
  %279 = vmatpush1.msra.mxu0 %v34
  %280 = vmatprep.subr.mxu0 0.0
  %281 = vmatpush1.msra.mxu0 %v35
  %282 = vmatprep.subr.mxu0 0.0
  %283 = vmatpush1.msra.mxu0 0.0
  %284 = vmatprep.subr.mxu0 0.0
  %285 = vmatpush1.msra.mxu0 0.0
  %286 = vmatprep.subr.mxu0 0.0
  %287 = vmatpush1.msra.mxu0 0.0
  %288 = vmatprep.subr.mxu0 0.0
  %289 = vmatpush1.msra.mxu0 0.0
  %290 = vmatprep.subr.mxu0 0.0
  %291 = vmatpush1.msra.mxu0 0.0
  %292 = vmatprep.subr.mxu0 0.0
  %293 = vmatpush1.msra.mxu0 0.0
  %294 = vmatprep.subr.mxu0 0.0
  %295 = vmatpush1.msra.mxu0 0.0
  %296 = vmatprep.subr.mxu0 0.0
  %297 = vmatpush1.msra.mxu0 0.0
  %298 = vmatprep.subr.mxu0 0.0
  %299 = vmatpush1.msra.mxu0 0.0
  %300 = vmatprep.subr.mxu0 0.0
  %301 = vmatpush1.msra.mxu0 0.0
  %302 = vmatprep.subr.mxu0 0.0
  %303 = vmatpush1.msra.mxu0 0.0
  %304 = vmatprep.subr.mxu0 0.0
  %305 = vmatpush1.msra.mxu0 0.0
  %306 = vmatprep.subr.mxu0 0.0
  %307 = vmatpush1.msra.mxu0 0.0
  %308 = vmatprep.subr.mxu0 0.0
  %309 = vmatpush1.msra.mxu0 0.0
  %310 = vmatprep.subr.mxu0 0.0
  %311 = vmatpush1.msra.mxu0 0.0
  %312 = vmatprep.subr.mxu0 0.0
  %313 = vmatpush1.msra.mxu0 0.0
  %314 = vmatprep.mubr.f32.mxu0 0.0
  %315 = vmatmul.mubr.f32.gmra.mrb[0].mxu0 %v249
  %v316 = vpop.f32.mrb[0].mxu0
  %v317 = vadd.f32 %v36, %v316
  %v318 = vpop.f32.mrb[0].mxu0
  %319 = vdwg.mxu0
  %v320 = vsel %vm91, %v317, 0.0
  %321 = vadd.xlane.f32.xlu0 %v320
  %v322 = vpop.xlane.xlu0 %321
  %v323 = vrcp.pop 64.0
  %v324 = vmul.f32 %v322, %v323
  %v325 = vsub.f32 %v317, %v324
  %v326 = vmul.f32 %v325, %v325
  %v327 = vsel %vm91, %v326, 0.0
  %328 = vadd.xlane.f32.xlu0 %v327
  %v329 = vpop.xlane.xlu0 %328
  %v330 = vmul.f32 %v329, %v323
  %v331 = vadd.f32 %v330, 1e-05
  %v332 = vrsqrt.pop %v331
  %v333 = vmul.f32 %v325, %v332
  %v334 = vlaneseq
  %v335 = vshrl.u32 %v334, 7
  %v336 = vsub.s32 0, %v335
  %v337 = vrot.slane %v37, %v336
  %v338 = vmul.f32 %v333, %v337
  %v339 = vlaneseq
  %v340 = vshrl.u32 %v339, 7
  %v341 = vsub.s32 0, %v340
  %v342 = vrot.slane %v38, %v341
  %v343 = vadd.f32 %v338, %v342
  %v344 = vld [vmem:[%s0] sm:$0xff]
  %v345 = vld [vmem:[%s0 + $0x8] sm:$0xff]
  %v346 = vld [vmem:[%s0 + $0x10] sm:$0xff]
  %v347 = vld [vmem:[%s0 + $0x18] sm:$0xff]
  %v348 = vld [vmem:[%s0 + $0x20] sm:$0xff]
  %v349 = vld [vmem:[%s0 + $0x28] sm:$0xff]
  %v350 = vld [vmem:[%s0 + $0x30] sm:$0xff]
  %v351 = vld [vmem:[%s0 + $0x38] sm:$0xff]
  %v352 = vlaneseq
  %v353 = vshrl.u32 %v352, 7
  %v354 = vsub.s32 0, %v353
  %v355 = vrot.slane %v58, %v354
  %vm356 = vcmask 64512
  %v358 = vsel %vm356, %v344, 0
  %v361 = vsel %vm356, %v345, 0
  %v364 = vsel %vm356, %v346, 0
  %v367 = vsel %vm356, %v347, 0
  %v370 = vsel %vm356, %v348, 0
  %v373 = vsel %vm356, %v349, 0
  %v376 = vsel %vm356, %v350, 0
  %v379 = vsel %vm356, %v351, 0
  %381 = vmatprep.subr.mxu0 0.0
  %382 = vmatpush1.msra.mxu0 %v57
  %383 = vmatprep.subr.mxu0 0.0
  %384 = vmatpush1.msra.mxu0 0.0
  %385 = vmatprep.subr.mxu0 0.0
  %386 = vmatpush1.msra.mxu0 0.0
  %387 = vmatprep.subr.mxu0 0.0
  %388 = vmatpush1.msra.mxu0 0.0
  %389 = vmatprep.subr.mxu0 0.0
  %390 = vmatpush1.msra.mxu0 0.0
  %391 = vmatprep.subr.mxu0 0.0
  %392 = vmatpush1.msra.mxu0 0.0
  %393 = vmatprep.subr.mxu0 0.0
  %394 = vmatpush1.msra.mxu0 0.0
  %395 = vmatprep.subr.mxu0 0.0
  %396 = vmatpush1.msra.mxu0 0.0
  %397 = vmatprep.subr.mxu0 0.0
  %398 = vmatpush1.msra.mxu0 0.0
  %399 = vmatprep.subr.mxu0 0.0
  %400 = vmatpush1.msra.mxu0 0.0
  %401 = vmatprep.subr.mxu0 0.0
  %402 = vmatpush1.msra.mxu0 0.0
  %403 = vmatprep.subr.mxu0 0.0
  %404 = vmatpush1.msra.mxu0 0.0
  %405 = vmatprep.subr.mxu0 0.0
  %406 = vmatpush1.msra.mxu0 0.0
  %407 = vmatprep.subr.mxu0 0.0
  %408 = vmatpush1.msra.mxu0 0.0
  %409 = vmatprep.subr.mxu0 0.0
  %410 = vmatpush1.msra.mxu0 0.0
  %411 = vmatprep.subr.mxu0 0.0
  %412 = vmatpush1.msra.mxu0 0.0
  %413 = vmatprep.subr.mxu0 0.0
  %414 = vmatpush1.msra.mxu0 0.0
  %415 = vmatprep.subr.mxu0 0.0
  %416 = vmatpush1.msra.mxu0 0.0
  %417 = vmatprep.subr.mxu0 0.0
  %418 = vmatpush1.msra.mxu0 0.0
  %419 = vmatprep.subr.mxu0 0.0
  %420 = vmatpush1.msra.mxu0 0.0
  %421 = vmatprep.subr.mxu0 0.0
  %422 = vmatpush1.msra.mxu0 0.0
  %423 = vmatprep.subr.mxu0 0.0
  %424 = vmatpush1.msra.mxu0 0.0
  %425 = vmatprep.subr.mxu0 0.0
  %426 = vmatpush1.msra.mxu0 0.0
  %427 = vmatprep.subr.mxu0 0.0
  %428 = vmatpush1.msra.mxu0 0.0
  %429 = vmatprep.subr.mxu0 0.0
  %430 = vmatpush1.msra.mxu0 0.0
  %431 = vmatprep.subr.mxu0 0.0
  %432 = vmatpush1.msra.mxu0 0.0
  %433 = vmatprep.subr.mxu0 0.0
  %434 = vmatpush1.msra.mxu0 0.0
  %435 = vmatprep.subr.mxu0 0.0
  %436 = vmatpush1.msra.mxu0 0.0
  %437 = vmatprep.subr.mxu0 0.0
  %438 = vmatpush1.msra.mxu0 0.0
  %439 = vmatprep.subr.mxu0 0.0
  %440 = vmatpush1.msra.mxu0 0.0
  %441 = vmatprep.subr.mxu0 0.0
  %442 = vmatpush1.msra.mxu0 0.0
  %443 = vmatprep.subr.mxu0 0.0
  %444 = vmatpush1.msra.mxu0 0.0
  %445 = vmatprep.mubr.f32.mxu0 0.0
  %446 = vmatmul.mubr.f32.gmra.mrb[0].mxu0 %v358
  %v447 = vpop.f32.mrb[0].mxu0
  %v448 = vadd.f32 %v355, %v447
  %v449 = vpop.f32.mrb[0].mxu0
  %450 = vmatprep.mubr.f32.mxu0 0.0
  %451 = vmatmul.mubr.f32.gmra.mrb[0].mxu0 %v361
  %v452 = vpop.f32.mrb[0].mxu0
  %v453 = vadd.f32 %v355, %v452
  %v454 = vpop.f32.mrb[0].mxu0
  %455 = vmatprep.mubr.f32.mxu0 0.0
  %456 = vmatmul.mubr.f32.gmra.mrb[0].mxu0 %v364
  %v457 = vpop.f32.mrb[0].mxu0
  %v458 = vadd.f32 %v355, %v457
  %v459 = vpop.f32.mrb[0].mxu0
  %460 = vmatprep.mubr.f32.mxu0 0.0
  %461 = vmatmul.mubr.f32.gmra.mrb[0].mxu0 %v367
  %v462 = vpop.f32.mrb[0].mxu0
  %v463 = vadd.f32 %v355, %v462
  %v464 = vpop.f32.mrb[0].mxu0
  %465 = vmatprep.mubr.f32.mxu0 0.0
  %466 = vmatmul.mubr.f32.gmra.mrb[0].mxu0 %v370
  %v467 = vpop.f32.mrb[0].mxu0
  %v468 = vadd.f32 %v355, %v467
  %v469 = vpop.f32.mrb[0].mxu0
  %470 = vmatprep.mubr.f32.mxu0 0.0
  %471 = vmatmul.mubr.f32.gmra.mrb[0].mxu0 %v373
  %v472 = vpop.f32.mrb[0].mxu0
  %v473 = vadd.f32 %v355, %v472
  %v474 = vpop.f32.mrb[0].mxu0
  %475 = vmatprep.mubr.f32.mxu0 0.0
  %476 = vmatmul.mubr.f32.gmra.mrb[0].mxu0 %v376
  %v477 = vpop.f32.mrb[0].mxu0
  %v478 = vadd.f32 %v355, %v477
  %v479 = vpop.f32.mrb[0].mxu0
  %480 = vmatprep.mubr.f32.mxu0 0.0
  %481 = vmatmul.mubr.f32.gmra.mrb[0].mxu0 %v379
  %v482 = vpop.f32.mrb[0].mxu0
  %v483 = vadd.f32 %v355, %v482
  %v484 = vpop.f32.mrb[0].mxu0
  %485 = vdwg.mxu0
  %v486 = vlaneseq
  %v487 = vshrl.u32 %v486, 7
  %v488 = vsub.s32 0, %v487
  %v489 = vrot.slane %v246, %v488
  %v490 = vadd.f32 %v448, %v489
  %v491 = vadd.f32 %v453, %v489
  %v492 = vadd.f32 %v458, %v489
  %v493 = vadd.f32 %v463, %v489
  %v494 = vadd.f32 %v468, %v489
  %v495 = vadd.f32 %v473, %v489
  %v496 = vadd.f32 %v478, %v489
  %v497 = vadd.f32 %v483, %v489
  %v498 = vld [vmem:[%s1] sm:$0xff]
  %v500 = vsel %vm91, %v498, 0
  %v503 = vsel %vm91, %v343, 0
  %505 = vmatprep.subr.mxu0 0.0
  %506 = vmatpush1.msra.mxu0 %v67
  %507 = vmatprep.subr.mxu0 0.0
  %508 = vmatpush1.msra.mxu0 %v68
  %509 = vmatprep.subr.mxu0 0.0
  %510 = vmatpush1.msra.mxu0 %v69
  %511 = vmatprep.subr.mxu0 0.0
  %512 = vmatpush1.msra.mxu0 %v70
  %513 = vmatprep.subr.mxu0 0.0
  %514 = vmatpush1.msra.mxu0 %v71
  %515 = vmatprep.subr.mxu0 0.0
  %516 = vmatpush1.msra.mxu0 %v72
  %517 = vmatprep.subr.mxu0 0.0
  %518 = vmatpush1.msra.mxu0 %v73
  %519 = vmatprep.subr.mxu0 0.0
  %520 = vmatpush1.msra.mxu0 %v74
  %521 = vmatprep.subr.mxu0 0.0
  %522 = vmatpush1.msra.mxu0 0.0
  %523 = vmatprep.subr.mxu0 0.0
  %524 = vmatpush1.msra.mxu0 0.0
  %525 = vmatprep.subr.mxu0 0.0
  %526 = vmatpush1.msra.mxu0 0.0
  %527 = vmatprep.subr.mxu0 0.0
  %528 = vmatpush1.msra.mxu0 0.0
  %529 = vmatprep.subr.mxu0 0.0
  %530 = vmatpush1.msra.mxu0 0.0
  %531 = vmatprep.subr.mxu0 0.0
  %532 = vmatpush1.msra.mxu0 0.0
  %533 = vmatprep.subr.mxu0 0.0
  %534 = vmatpush1.msra.mxu0 0.0
  %535 = vmatprep.subr.mxu0 0.0
  %536 = vmatpush1.msra.mxu0 0.0
  %537 = vmatprep.subr.mxu0 0.0
  %538 = vmatpush1.msra.mxu0 0.0
  %539 = vmatprep.subr.mxu0 0.0
  %540 = vmatpush1.msra.mxu0 0.0
  %541 = vmatprep.subr.mxu0 0.0
  %542 = vmatpush1.msra.mxu0 0.0
  %543 = vmatprep.subr.mxu0 0.0
  %544 = vmatpush1.msra.mxu0 0.0
  %545 = vmatprep.subr.mxu0 0.0
  %546 = vmatpush1.msra.mxu0 0.0
  %547 = vmatprep.subr.mxu0 0.0
  %548 = vmatpush1.msra.mxu0 0.0
  %549 = vmatprep.subr.mxu0 0.0
  %550 = vmatpush1.msra.mxu0 0.0
  %551 = vmatprep.subr.mxu0 0.0
  %552 = vmatpush1.msra.mxu0 0.0
  %553 = vmatprep.subr.mxu0 0.0
  %554 = vmatpush1.msra.mxu0 0.0
  %555 = vmatprep.subr.mxu0 0.0
  %556 = vmatpush1.msra.mxu0 0.0
  %557 = vmatprep.subr.mxu0 0.0
  %558 = vmatpush1.msra.mxu0 0.0
  %559 = vmatprep.subr.mxu0 0.0
  %560 = vmatpush1.msra.mxu0 0.0
  %561 = vmatprep.subr.mxu0 0.0
  %562 = vmatpush1.msra.mxu0 0.0
  %563 = vmatprep.subr.mxu0 0.0
  %564 = vmatpush1.msra.mxu0 0.0
  %565 = vmatprep.subr.mxu0 0.0
  %566 = vmatpush1.msra.mxu0 0.0
  %567 = vmatprep.subr.mxu0 0.0
  %568 = vmatpush1.msra.mxu0 0.0
  %569 = vmatprep.mubr.f32.mxu0 0.0
  %570 = vmatmul.mubr.f32.gmra.mrb[0].mxu0 %v500
  %v571 = vpop.f32.mrb[0].mxu0
  %v572 = vadd.f32 0.0, %v571
  %v573 = vpop.f32.mrb[0].mxu0
  %574 = vmatprep.mubr.f32.mxu0 0.0
  %575 = vmatmul.mubr.f32.gmra.mrb[0].mxu0 %v503
  %v576 = vpop.f32.mrb[0].mxu0
  %v577 = vadd.f32 0.0, %v576
  %v578 = vpop.f32.mrb[0].mxu0
  %579 = vdwg.mxu0
  %v581 = vsel %vm91, %v490, 0
  %v584 = vsel %vm91, %v491, 0
  %v587 = vsel %vm91, %v492, 0
  %v590 = vsel %vm91, %v493, 0
  %v593 = vsel %vm91, %v494, 0
  %v596 = vsel %vm91, %v495, 0
  %v599 = vsel %vm91, %v496, 0
  %v602 = vsel %vm91, %v497, 0
  %604 = vmatprep.subr.mxu0 0.0
  %605 = vmatpush1.msra.mxu0 %v59
  %606 = vmatprep.subr.mxu0 0.0
  %607 = vmatpush1.msra.mxu0 %v60
  %608 = vmatprep.subr.mxu0 0.0
  %609 = vmatpush1.msra.mxu0 %v61
  %610 = vmatprep.subr.mxu0 0.0
  %611 = vmatpush1.msra.mxu0 %v62
  %612 = vmatprep.subr.mxu0 0.0
  %613 = vmatpush1.msra.mxu0 %v63
  %614 = vmatprep.subr.mxu0 0.0
  %615 = vmatpush1.msra.mxu0 %v64
  %616 = vmatprep.subr.mxu0 0.0
  %617 = vmatpush1.msra.mxu0 %v65
  %618 = vmatprep.subr.mxu0 0.0
  %619 = vmatpush1.msra.mxu0 %v66
  %620 = vmatprep.subr.mxu0 0.0
  %621 = vmatpush1.msra.mxu0 0.0
  %622 = vmatprep.subr.mxu0 0.0
  %623 = vmatpush1.msra.mxu0 0.0
  %624 = vmatprep.subr.mxu0 0.0
  %625 = vmatpush1.msra.mxu0 0.0
  %626 = vmatprep.subr.mxu0 0.0
  %627 = vmatpush1.msra.mxu0 0.0
  %628 = vmatprep.subr.mxu0 0.0
  %629 = vmatpush1.msra.mxu0 0.0
  %630 = vmatprep.subr.mxu0 0.0
  %631 = vmatpush1.msra.mxu0 0.0
  %632 = vmatprep.subr.mxu0 0.0
  %633 = vmatpush1.msra.mxu0 0.0
  %634 = vmatprep.subr.mxu0 0.0
  %635 = vmatpush1.msra.mxu0 0.0
  %636 = vmatprep.subr.mxu0 0.0
  %637 = vmatpush1.msra.mxu0 0.0
  %638 = vmatprep.subr.mxu0 0.0
  %639 = vmatpush1.msra.mxu0 0.0
  %640 = vmatprep.subr.mxu0 0.0
  %641 = vmatpush1.msra.mxu0 0.0
  %642 = vmatprep.subr.mxu0 0.0
  %643 = vmatpush1.msra.mxu0 0.0
  %644 = vmatprep.subr.mxu0 0.0
  %645 = vmatpush1.msra.mxu0 0.0
  %646 = vmatprep.subr.mxu0 0.0
  %647 = vmatpush1.msra.mxu0 0.0
  %648 = vmatprep.subr.mxu0 0.0
  %649 = vmatpush1.msra.mxu0 0.0
  %650 = vmatprep.subr.mxu0 0.0
  %651 = vmatpush1.msra.mxu0 0.0
  %652 = vmatprep.subr.mxu0 0.0
  %653 = vmatpush1.msra.mxu0 0.0
  %654 = vmatprep.subr.mxu0 0.0
  %655 = vmatpush1.msra.mxu0 0.0
  %656 = vmatprep.subr.mxu0 0.0
  %657 = vmatpush1.msra.mxu0 0.0
  %658 = vmatprep.subr.mxu0 0.0
  %659 = vmatpush1.msra.mxu0 0.0
  %660 = vmatprep.subr.mxu0 0.0
  %661 = vmatpush1.msra.mxu0 0.0
  %662 = vmatprep.subr.mxu0 0.0
  %663 = vmatpush1.msra.mxu0 0.0
  %664 = vmatprep.subr.mxu0 0.0
  %665 = vmatpush1.msra.mxu0 0.0
  %666 = vmatprep.subr.mxu0 0.0
  %667 = vmatpush1.msra.mxu0 0.0
  %668 = vmatprep.mubr.f32.mxu0 0.0
  %669 = vmatmul.mubr.f32.gmra.mrb[0].mxu0 %v581
  %v670 = vpop.f32.mrb[0].mxu0
  %v671 = vadd.f32 0.0, %v670
  %v672 = vpop.f32.mrb[0].mxu0
  %673 = vmatprep.mubr.f32.mxu0 0.0
  %674 = vmatmul.mubr.f32.gmra.mrb[0].mxu0 %v584
  %v675 = vpop.f32.mrb[0].mxu0
  %v676 = vadd.f32 0.0, %v675
  %v677 = vpop.f32.mrb[0].mxu0
  %678 = vmatprep.mubr.f32.mxu0 0.0
  %679 = vmatmul.mubr.f32.gmra.mrb[0].mxu0 %v587
  %v680 = vpop.f32.mrb[0].mxu0
  %v681 = vadd.f32 0.0, %v680
  %v682 = vpop.f32.mrb[0].mxu0
  %683 = vmatprep.mubr.f32.mxu0 0.0
  %684 = vmatmul.mubr.f32.gmra.mrb[0].mxu0 %v590
  %v685 = vpop.f32.mrb[0].mxu0
  %v686 = vadd.f32 0.0, %v685
  %v687 = vpop.f32.mrb[0].mxu0
  %688 = vmatprep.mubr.f32.mxu0 0.0
  %689 = vmatmul.mubr.f32.gmra.mrb[0].mxu0 %v593
  %v690 = vpop.f32.mrb[0].mxu0
  %v691 = vadd.f32 0.0, %v690
  %v692 = vpop.f32.mrb[0].mxu0
  %693 = vmatprep.mubr.f32.mxu0 0.0
  %694 = vmatmul.mubr.f32.gmra.mrb[0].mxu0 %v596
  %v695 = vpop.f32.mrb[0].mxu0
  %v696 = vadd.f32 0.0, %v695
  %v697 = vpop.f32.mrb[0].mxu0
  %698 = vmatprep.mubr.f32.mxu0 0.0
  %699 = vmatmul.mubr.f32.gmra.mrb[0].mxu0 %v599
  %v700 = vpop.f32.mrb[0].mxu0
  %v701 = vadd.f32 0.0, %v700
  %v702 = vpop.f32.mrb[0].mxu0
  %703 = vmatprep.mubr.f32.mxu0 0.0
  %704 = vmatmul.mubr.f32.gmra.mrb[0].mxu0 %v602
  %v705 = vpop.f32.mrb[0].mxu0
  %v706 = vadd.f32 0.0, %v705
  %v707 = vpop.f32.mrb[0].mxu0
  %708 = vdwg.mxu0
  %v709 = vlaneseq
  %v710 = vshrl.u32 %v709, 7
  %v711 = vsub.s32 0, %v710
  %v712 = vrot.slane %v85, %v711
  %v714 = vsel %vm91, %v671, 0
  %v717 = vsel %vm91, %v676, 0
  %v720 = vsel %vm91, %v681, 0
  %v723 = vsel %vm91, %v686, 0
  %v726 = vsel %vm91, %v691, 0
  %v729 = vsel %vm91, %v696, 0
  %v732 = vsel %vm91, %v701, 0
  %v735 = vsel %vm91, %v706, 0
  %v738 = vsel %vm91, %v572, 0
  %v741 = vsel %vm91, %v577, 0
  %743 = vmatprep.subr.mxu0 0.0
  %744 = vmatpush1.xpose.msra.mxu0 %v738
  %745 = vmatprep.subr.mxu0 0.0
  %746 = vmatpush1.xpose.msra.mxu0 %v741
  %747 = vmatprep.subr.mxu0 0.0
  %748 = vmatpush1.xpose.msra.mxu0 0.0
  %749 = vmatprep.subr.mxu0 0.0
  %750 = vmatpush1.xpose.msra.mxu0 0.0
  %751 = vmatprep.subr.mxu0 0.0
  %752 = vmatpush1.xpose.msra.mxu0 0.0
  %753 = vmatprep.subr.mxu0 0.0
  %754 = vmatpush1.xpose.msra.mxu0 0.0
  %755 = vmatprep.subr.mxu0 0.0
  %756 = vmatpush1.xpose.msra.mxu0 0.0
  %757 = vmatprep.subr.mxu0 0.0
  %758 = vmatpush1.xpose.msra.mxu0 0.0
  %759 = vmatprep.subr.mxu0 0.0
  %760 = vmatpush1.xpose.msra.mxu0 0.0
  %761 = vmatprep.subr.mxu0 0.0
  %762 = vmatpush1.xpose.msra.mxu0 0.0
  %763 = vmatprep.subr.mxu0 0.0
  %764 = vmatpush1.xpose.msra.mxu0 0.0
  %765 = vmatprep.subr.mxu0 0.0
  %766 = vmatpush1.xpose.msra.mxu0 0.0
  %767 = vmatprep.subr.mxu0 0.0
  %768 = vmatpush1.xpose.msra.mxu0 0.0
  %769 = vmatprep.subr.mxu0 0.0
  %770 = vmatpush1.xpose.msra.mxu0 0.0
  %771 = vmatprep.subr.mxu0 0.0
  %772 = vmatpush1.xpose.msra.mxu0 0.0
  %773 = vmatprep.subr.mxu0 0.0
  %774 = vmatpush1.xpose.msra.mxu0 0.0
  %775 = vmatprep.subr.mxu0 0.0
  %776 = vmatpush1.xpose.msra.mxu0 0.0
  %777 = vmatprep.subr.mxu0 0.0
  %778 = vmatpush1.xpose.msra.mxu0 0.0
  %779 = vmatprep.subr.mxu0 0.0
  %780 = vmatpush1.xpose.msra.mxu0 0.0
  %781 = vmatprep.subr.mxu0 0.0
  %782 = vmatpush1.xpose.msra.mxu0 0.0
  %783 = vmatprep.subr.mxu0 0.0
  %784 = vmatpush1.xpose.msra.mxu0 0.0
  %785 = vmatprep.subr.mxu0 0.0
  %786 = vmatpush1.xpose.msra.mxu0 0.0
  %787 = vmatprep.subr.mxu0 0.0
  %788 = vmatpush1.xpose.msra.mxu0 0.0
  %789 = vmatprep.subr.mxu0 0.0
  %790 = vmatpush1.xpose.msra.mxu0 0.0
  %791 = vmatprep.subr.mxu0 0.0
  %792 = vmatpush1.xpose.msra.mxu0 0.0
  %793 = vmatprep.subr.mxu0 0.0
  %794 = vmatpush1.xpose.msra.mxu0 0.0
  %795 = vmatprep.subr.mxu0 0.0
  %796 = vmatpush1.xpose.msra.mxu0 0.0
  %797 = vmatprep.subr.mxu0 0.0
  %798 = vmatpush1.xpose.msra.mxu0 0.0
  %799 = vmatprep.subr.mxu0 0.0
  %800 = vmatpush1.xpose.msra.mxu0 0.0
  %801 = vmatprep.subr.mxu0 0.0
  %802 = vmatpush1.xpose.msra.mxu0 0.0
  %803 = vmatprep.subr.mxu0 0.0
  %804 = vmatpush1.xpose.msra.mxu0 0.0
  %805 = vmatprep.subr.mxu0 0.0
  %806 = vmatpush1.xpose.msra.mxu0 0.0
  %807 = vmatprep.mubr.f32.mxu0 0.0
  %808 = vmatmul.mubr.f32.gmra.mrb[0].mxu0 %v714
  %v809 = vpop.f32.mrb[0].mxu0
  %v810 = vadd.f32 %v712, %v809
  %v811 = vpop.f32.mrb[0].mxu0
  %812 = vmatprep.mubr.f32.mxu0 0.0
  %813 = vmatmul.mubr.f32.gmra.mrb[0].mxu0 %v717
  %v814 = vpop.f32.mrb[0].mxu0
  %v815 = vadd.f32 %v712, %v814
  %v816 = vpop.f32.mrb[0].mxu0
  %817 = vmatprep.mubr.f32.mxu0 0.0
  %818 = vmatmul.mubr.f32.gmra.mrb[0].mxu0 %v720
  %v819 = vpop.f32.mrb[0].mxu0
  %v820 = vadd.f32 %v712, %v819
  %v821 = vpop.f32.mrb[0].mxu0
  %822 = vmatprep.mubr.f32.mxu0 0.0
  %823 = vmatmul.mubr.f32.gmra.mrb[0].mxu0 %v723
  %v824 = vpop.f32.mrb[0].mxu0
  %v825 = vadd.f32 %v712, %v824
  %v826 = vpop.f32.mrb[0].mxu0
  %827 = vmatprep.mubr.f32.mxu0 0.0
  %828 = vmatmul.mubr.f32.gmra.mrb[0].mxu0 %v726
  %v829 = vpop.f32.mrb[0].mxu0
  %v830 = vadd.f32 %v712, %v829
  %v831 = vpop.f32.mrb[0].mxu0
  %832 = vmatprep.mubr.f32.mxu0 0.0
  %833 = vmatmul.mubr.f32.gmra.mrb[0].mxu0 %v729
  %v834 = vpop.f32.mrb[0].mxu0
  %v835 = vadd.f32 %v712, %v834
  %v836 = vpop.f32.mrb[0].mxu0
  %837 = vmatprep.mubr.f32.mxu0 0.0
  %838 = vmatmul.mubr.f32.gmra.mrb[0].mxu0 %v732
  %v839 = vpop.f32.mrb[0].mxu0
  %v840 = vadd.f32 %v712, %v839
  %v841 = vpop.f32.mrb[0].mxu0
  %842 = vmatprep.mubr.f32.mxu0 0.0
  %843 = vmatmul.mubr.f32.gmra.mrb[0].mxu0 %v735
  %v844 = vpop.f32.mrb[0].mxu0
  %v845 = vadd.f32 %v712, %v844
  %v846 = vpop.f32.mrb[0].mxu0
  %847 = vdwg.mxu0
  %vm848 = vcmask 130048
  %v849 = vsel %vm848, %v810, -inf
  %850 = vmax.xlane.f32.xlu0 %v849
  %v851 = vpop.xlane.xlu0 %850
  %v852 = vsel %vm848, %v815, -inf
  %853 = vmax.xlane.f32.xlu0 %v852
  %v854 = vpop.xlane.xlu0 %853
  %v855 = vsel %vm848, %v820, -inf
  %856 = vmax.xlane.f32.xlu0 %v855
  %v857 = vpop.xlane.xlu0 %856
  %v858 = vsel %vm848, %v825, -inf
  %859 = vmax.xlane.f32.xlu0 %v858
  %v860 = vpop.xlane.xlu0 %859
  %v861 = vsel %vm848, %v830, -inf
  %862 = vmax.xlane.f32.xlu0 %v861
  %v863 = vpop.xlane.xlu0 %862
  %v864 = vsel %vm848, %v835, -inf
  %865 = vmax.xlane.f32.xlu0 %v864
  %v866 = vpop.xlane.xlu0 %865
  %v867 = vsel %vm848, %v840, -inf
  %868 = vmax.xlane.f32.xlu0 %v867
  %v869 = vpop.xlane.xlu0 %868
  %v870 = vsel %vm848, %v845, -inf
  %871 = vmax.xlane.f32.xlu0 %v870
  %v872 = vpop.xlane.xlu0 %871
  %v873 = vsub.f32 %v810, %v851
  %v874 = vsub.f32 %v815, %v854
  %v875 = vsub.f32 %v820, %v857
  %v876 = vsub.f32 %v825, %v860
  %v877 = vsub.f32 %v830, %v863
  %v878 = vsub.f32 %v835, %v866
  %v879 = vsub.f32 %v840, %v869
  %v880 = vsub.f32 %v845, %v872
  %v881 = vmul.f32 %v873, 1.442695
  %v882 = vpow.pop %v881
  %v883 = vmul.f32 %v874, 1.442695
  %v884 = vpow.pop %v883
  %v885 = vmul.f32 %v875, 1.442695
  %v886 = vpow.pop %v885
  %v887 = vmul.f32 %v876, 1.442695
  %v888 = vpow.pop %v887
  %v889 = vmul.f32 %v877, 1.442695
  %v890 = vpow.pop %v889
  %v891 = vmul.f32 %v878, 1.442695
  %v892 = vpow.pop %v891
  %v893 = vmul.f32 %v879, 1.442695
  %v894 = vpow.pop %v893
  %v895 = vmul.f32 %v880, 1.442695
  %v896 = vpow.pop %v895
  %v897 = vsel %vm848, %v882, 0.0
  %898 = vadd.xlane.f32.xlu0 %v897
  %v899 = vpop.xlane.xlu0 %898
  %v900 = vsel %vm848, %v884, 0.0
  %901 = vadd.xlane.f32.xlu0 %v900
  %v902 = vpop.xlane.xlu0 %901
  %v903 = vsel %vm848, %v886, 0.0
  %904 = vadd.xlane.f32.xlu0 %v903
  %v905 = vpop.xlane.xlu0 %904
  %v906 = vsel %vm848, %v888, 0.0
  %907 = vadd.xlane.f32.xlu0 %v906
  %v908 = vpop.xlane.xlu0 %907
  %v909 = vsel %vm848, %v890, 0.0
  %910 = vadd.xlane.f32.xlu0 %v909
  %v911 = vpop.xlane.xlu0 %910
  %v912 = vsel %vm848, %v892, 0.0
  %913 = vadd.xlane.f32.xlu0 %v912
  %v914 = vpop.xlane.xlu0 %913
  %v915 = vsel %vm848, %v894, 0.0
  %916 = vadd.xlane.f32.xlu0 %v915
  %v917 = vpop.xlane.xlu0 %916
  %v918 = vsel %vm848, %v896, 0.0
  %919 = vadd.xlane.f32.xlu0 %v918
  %v920 = vpop.xlane.xlu0 %919
  %v921 = vrcp.pop %v899
  %v922 = vmul.f32 %v882, %v921
  %v923 = vrcp.pop %v902
  %v924 = vmul.f32 %v884, %v923
  %v925 = vrcp.pop %v905
  %v926 = vmul.f32 %v886, %v925
  %v927 = vrcp.pop %v908
  %v928 = vmul.f32 %v888, %v927
  %v929 = vrcp.pop %v911
  %v930 = vmul.f32 %v890, %v929
  %v931 = vrcp.pop %v914
  %v932 = vmul.f32 %v892, %v931
  %v933 = vrcp.pop %v917
  %v934 = vmul.f32 %v894, %v933
  %v935 = vrcp.pop %v920
  %v936 = vmul.f32 %v896, %v935
  %937 = vrot.lane.b32.xlu0 %v572, 64
  %v938 = vpop.permute.xlu0 %937
  %939 = vrot.lane.b32.xlu0 %v577, 64
  %v940 = vpop.permute.xlu0 %939
  %v944 = vsel %vm848, %v922, 0
  %v947 = vsel %vm848, %v924, 0
  %v950 = vsel %vm848, %v926, 0
  %v953 = vsel %vm848, %v928, 0
  %v956 = vsel %vm848, %v930, 0
  %v959 = vsel %vm848, %v932, 0
  %v962 = vsel %vm848, %v934, 0
  %v965 = vsel %vm848, %v936, 0
  %967 = vmatprep.subr.mxu0 0.0
  %968 = vmatpush1.msra.mxu0 %v938
  %969 = vmatprep.subr.mxu0 0.0
  %970 = vmatpush1.msra.mxu0 %v940
  %971 = vmatprep.subr.mxu0 0.0
  %972 = vmatpush1.msra.mxu0 0.0
  %973 = vmatprep.subr.mxu0 0.0
  %974 = vmatpush1.msra.mxu0 0.0
  %975 = vmatprep.subr.mxu0 0.0
  %976 = vmatpush1.msra.mxu0 0.0
  %977 = vmatprep.subr.mxu0 0.0
  %978 = vmatpush1.msra.mxu0 0.0
  %979 = vmatprep.subr.mxu0 0.0
  %980 = vmatpush1.msra.mxu0 0.0
  %981 = vmatprep.subr.mxu0 0.0
  %982 = vmatpush1.msra.mxu0 0.0
  %983 = vmatprep.subr.mxu0 0.0
  %984 = vmatpush1.msra.mxu0 0.0
  %985 = vmatprep.subr.mxu0 0.0
  %986 = vmatpush1.msra.mxu0 0.0
  %987 = vmatprep.subr.mxu0 0.0
  %988 = vmatpush1.msra.mxu0 0.0
  %989 = vmatprep.subr.mxu0 0.0
  %990 = vmatpush1.msra.mxu0 0.0
  %991 = vmatprep.subr.mxu0 0.0
  %992 = vmatpush1.msra.mxu0 0.0
  %993 = vmatprep.subr.mxu0 0.0
  %994 = vmatpush1.msra.mxu0 0.0
  %995 = vmatprep.subr.mxu0 0.0
  %996 = vmatpush1.msra.mxu0 0.0
  %997 = vmatprep.subr.mxu0 0.0
  %998 = vmatpush1.msra.mxu0 0.0
  %999 = vmatprep.subr.mxu0 0.0
  %1000 = vmatpush1.msra.mxu0 0.0
  %1001 = vmatprep.subr.mxu0 0.0
  %1002 = vmatpush1.msra.mxu0 0.0
  %1003 = vmatprep.subr.mxu0 0.0
  %1004 = vmatpush1.msra.mxu0 0.0
  %1005 = vmatprep.subr.mxu0 0.0
  %1006 = vmatpush1.msra.mxu0 0.0
  %1007 = vmatprep.subr.mxu0 0.0
  %1008 = vmatpush1.msra.mxu0 0.0
  %1009 = vmatprep.subr.mxu0 0.0
  %1010 = vmatpush1.msra.mxu0 0.0
  %1011 = vmatprep.subr.mxu0 0.0
  %1012 = vmatpush1.msra.mxu0 0.0
  %1013 = vmatprep.subr.mxu0 0.0
  %1014 = vmatpush1.msra.mxu0 0.0
  %1015 = vmatprep.subr.mxu0 0.0
  %1016 = vmatpush1.msra.mxu0 0.0
  %1017 = vmatprep.subr.mxu0 0.0
  %1018 = vmatpush1.msra.mxu0 0.0
  %1019 = vmatprep.subr.mxu0 0.0
  %1020 = vmatpush1.msra.mxu0 0.0
  %1021 = vmatprep.subr.mxu0 0.0
  %1022 = vmatpush1.msra.mxu0 0.0
  %1023 = vmatprep.subr.mxu0 0.0
  %1024 = vmatpush1.msra.mxu0 0.0
  %1025 = vmatprep.subr.mxu0 0.0
  %1026 = vmatpush1.msra.mxu0 0.0
  %1027 = vmatprep.subr.mxu0 0.0
  %1028 = vmatpush1.msra.mxu0 0.0
  %1029 = vmatprep.subr.mxu0 0.0
  %1030 = vmatpush1.msra.mxu0 0.0
  %1031 = vmatprep.mubr.f32.mxu0 0.0
  %1032 = vmatmul.mubr.f32.gmra.mrb[0].mxu0 %v944
  %v1033 = vpop.f32.mrb[0].mxu0
  %v1034 = vadd.f32 0.0, %v1033
  %v1035 = vpop.f32.mrb[0].mxu0
  %1036 = vmatprep.mubr.f32.mxu0 0.0
  %1037 = vmatmul.mubr.f32.gmra.mrb[0].mxu0 %v947
  %v1038 = vpop.f32.mrb[0].mxu0
  %v1039 = vadd.f32 0.0, %v1038
  %v1040 = vpop.f32.mrb[0].mxu0
  %1041 = vmatprep.mubr.f32.mxu0 0.0
  %1042 = vmatmul.mubr.f32.gmra.mrb[0].mxu0 %v950
  %v1043 = vpop.f32.mrb[0].mxu0
  %v1044 = vadd.f32 0.0, %v1043
  %v1045 = vpop.f32.mrb[0].mxu0
  %1046 = vmatprep.mubr.f32.mxu0 0.0
  %1047 = vmatmul.mubr.f32.gmra.mrb[0].mxu0 %v953
  %v1048 = vpop.f32.mrb[0].mxu0
  %v1049 = vadd.f32 0.0, %v1048
  %v1050 = vpop.f32.mrb[0].mxu0
  %1051 = vmatprep.mubr.f32.mxu0 0.0
  %1052 = vmatmul.mubr.f32.gmra.mrb[0].mxu0 %v956
  %v1053 = vpop.f32.mrb[0].mxu0
  %v1054 = vadd.f32 0.0, %v1053
  %v1055 = vpop.f32.mrb[0].mxu0
  %1056 = vmatprep.mubr.f32.mxu0 0.0
  %1057 = vmatmul.mubr.f32.gmra.mrb[0].mxu0 %v959
  %v1058 = vpop.f32.mrb[0].mxu0
  %v1059 = vadd.f32 0.0, %v1058
  %v1060 = vpop.f32.mrb[0].mxu0
  %1061 = vmatprep.mubr.f32.mxu0 0.0
  %1062 = vmatmul.mubr.f32.gmra.mrb[0].mxu0 %v962
  %v1063 = vpop.f32.mrb[0].mxu0
  %v1064 = vadd.f32 0.0, %v1063
  %v1065 = vpop.f32.mrb[0].mxu0
  %1066 = vmatprep.mubr.f32.mxu0 0.0
  %1067 = vmatmul.mubr.f32.gmra.mrb[0].mxu0 %v965
  %v1068 = vpop.f32.mrb[0].mxu0
  %v1069 = vadd.f32 0.0, %v1068
  %v1070 = vpop.f32.mrb[0].mxu0
  %1071 = vdwg.mxu0
  %v1073 = vsel %vm91, %v1034, 0
  %v1076 = vsel %vm91, %v1039, 0
  %v1079 = vsel %vm91, %v1044, 0
  %v1082 = vsel %vm91, %v1049, 0
  %v1085 = vsel %vm91, %v1054, 0
  %v1088 = vsel %vm91, %v1059, 0
  %v1091 = vsel %vm91, %v1064, 0
  %v1094 = vsel %vm91, %v1069, 0
  %1096 = vmatprep.subr.mxu0 0.0
  %1097 = vmatpush1.msra.mxu0 %v75
  %1098 = vmatprep.subr.mxu0 0.0
  %1099 = vmatpush1.msra.mxu0 %v76
  %1100 = vmatprep.subr.mxu0 0.0
  %1101 = vmatpush1.msra.mxu0 %v77
  %1102 = vmatprep.subr.mxu0 0.0
  %1103 = vmatpush1.msra.mxu0 %v78
  %1104 = vmatprep.subr.mxu0 0.0
  %1105 = vmatpush1.msra.mxu0 %v79
  %1106 = vmatprep.subr.mxu0 0.0
  %1107 = vmatpush1.msra.mxu0 %v80
  %1108 = vmatprep.subr.mxu0 0.0
  %1109 = vmatpush1.msra.mxu0 %v81
  %1110 = vmatprep.subr.mxu0 0.0
  %1111 = vmatpush1.msra.mxu0 %v82
  %1112 = vmatprep.subr.mxu0 0.0
  %1113 = vmatpush1.msra.mxu0 0.0
  %1114 = vmatprep.subr.mxu0 0.0
  %1115 = vmatpush1.msra.mxu0 0.0
  %1116 = vmatprep.subr.mxu0 0.0
  %1117 = vmatpush1.msra.mxu0 0.0
  %1118 = vmatprep.subr.mxu0 0.0
  %1119 = vmatpush1.msra.mxu0 0.0
  %1120 = vmatprep.subr.mxu0 0.0
  %1121 = vmatpush1.msra.mxu0 0.0
  %1122 = vmatprep.subr.mxu0 0.0
  %1123 = vmatpush1.msra.mxu0 0.0
  %1124 = vmatprep.subr.mxu0 0.0
  %1125 = vmatpush1.msra.mxu0 0.0
  %1126 = vmatprep.subr.mxu0 0.0
  %1127 = vmatpush1.msra.mxu0 0.0
  %1128 = vmatprep.subr.mxu0 0.0
  %1129 = vmatpush1.msra.mxu0 0.0
  %1130 = vmatprep.subr.mxu0 0.0
  %1131 = vmatpush1.msra.mxu0 0.0
  %1132 = vmatprep.subr.mxu0 0.0
  %1133 = vmatpush1.msra.mxu0 0.0
  %1134 = vmatprep.subr.mxu0 0.0
  %1135 = vmatpush1.msra.mxu0 0.0
  %1136 = vmatprep.subr.mxu0 0.0
  %1137 = vmatpush1.msra.mxu0 0.0
  %1138 = vmatprep.subr.mxu0 0.0
  %1139 = vmatpush1.msra.mxu0 0.0
  %1140 = vmatprep.subr.mxu0 0.0
  %1141 = vmatpush1.msra.mxu0 0.0
  %1142 = vmatprep.subr.mxu0 0.0
  %1143 = vmatpush1.msra.mxu0 0.0
  %1144 = vmatprep.subr.mxu0 0.0
  %1145 = vmatpush1.msra.mxu0 0.0
  %1146 = vmatprep.subr.mxu0 0.0
  %1147 = vmatpush1.msra.mxu0 0.0
  %1148 = vmatprep.subr.mxu0 0.0
  %1149 = vmatpush1.msra.mxu0 0.0
  %1150 = vmatprep.subr.mxu0 0.0
  %1151 = vmatpush1.msra.mxu0 0.0
  %1152 = vmatprep.subr.mxu0 0.0
  %1153 = vmatpush1.msra.mxu0 0.0
  %1154 = vmatprep.subr.mxu0 0.0
  %1155 = vmatpush1.msra.mxu0 0.0
  %1156 = vmatprep.subr.mxu0 0.0
  %1157 = vmatpush1.msra.mxu0 0.0
  %1158 = vmatprep.subr.mxu0 0.0
  %1159 = vmatpush1.msra.mxu0 0.0
  %1160 = vmatprep.mubr.f32.mxu0 0.0
  %1161 = vmatmul.mubr.f32.gmra.mrb[0].mxu0 %v1073
  %v1162 = vpop.f32.mrb[0].mxu0
  %v1163 = vadd.f32 0.0, %v1162
  %v1164 = vpop.f32.mrb[0].mxu0
  %1165 = vmatprep.mubr.f32.mxu0 0.0
  %1166 = vmatmul.mubr.f32.gmra.mrb[0].mxu0 %v1076
  %v1167 = vpop.f32.mrb[0].mxu0
  %v1168 = vadd.f32 0.0, %v1167
  %v1169 = vpop.f32.mrb[0].mxu0
  %1170 = vmatprep.mubr.f32.mxu0 0.0
  %1171 = vmatmul.mubr.f32.gmra.mrb[0].mxu0 %v1079
  %v1172 = vpop.f32.mrb[0].mxu0
  %v1173 = vadd.f32 0.0, %v1172
  %v1174 = vpop.f32.mrb[0].mxu0
  %1175 = vmatprep.mubr.f32.mxu0 0.0
  %1176 = vmatmul.mubr.f32.gmra.mrb[0].mxu0 %v1082
  %v1177 = vpop.f32.mrb[0].mxu0
  %v1178 = vadd.f32 0.0, %v1177
  %v1179 = vpop.f32.mrb[0].mxu0
  %1180 = vmatprep.mubr.f32.mxu0 0.0
  %1181 = vmatmul.mubr.f32.gmra.mrb[0].mxu0 %v1085
  %v1182 = vpop.f32.mrb[0].mxu0
  %v1183 = vadd.f32 0.0, %v1182
  %v1184 = vpop.f32.mrb[0].mxu0
  %1185 = vmatprep.mubr.f32.mxu0 0.0
  %1186 = vmatmul.mubr.f32.gmra.mrb[0].mxu0 %v1088
  %v1187 = vpop.f32.mrb[0].mxu0
  %v1188 = vadd.f32 0.0, %v1187
  %v1189 = vpop.f32.mrb[0].mxu0
  %1190 = vmatprep.mubr.f32.mxu0 0.0
  %1191 = vmatmul.mubr.f32.gmra.mrb[0].mxu0 %v1091
  %v1192 = vpop.f32.mrb[0].mxu0
  %v1193 = vadd.f32 0.0, %v1192
  %v1194 = vpop.f32.mrb[0].mxu0
  %1195 = vmatprep.mubr.f32.mxu0 0.0
  %1196 = vmatmul.mubr.f32.gmra.mrb[0].mxu0 %v1094
  %v1197 = vpop.f32.mrb[0].mxu0
  %v1198 = vadd.f32 0.0, %v1197
  %v1199 = vpop.f32.mrb[0].mxu0
  %1200 = vdwg.mxu0
  %v1201 = vadd.f32 %v490, %v1163
  %v1202 = vadd.f32 %v491, %v1168
  %v1203 = vadd.f32 %v492, %v1173
  %v1204 = vadd.f32 %v493, %v1178
  %v1205 = vadd.f32 %v494, %v1183
  %v1206 = vadd.f32 %v495, %v1188
  %v1207 = vadd.f32 %v496, %v1193
  %v1208 = vadd.f32 %v497, %v1198
  %v1210 = vsel %vm91, %v83, 0
  %v1213 = vsel %vm91, %v1201, 0
  %v1216 = vsel %vm91, %v1202, 0
  %v1219 = vsel %vm91, %v1203, 0
  %v1222 = vsel %vm91, %v1204, 0
  %v1225 = vsel %vm91, %v1205, 0
  %v1228 = vsel %vm91, %v1206, 0
  %v1231 = vsel %vm91, %v1207, 0
  %v1234 = vsel %vm91, %v1208, 0
  %1236 = vmatprep.subr.mxu0 0.0
  %1237 = vmatpush1.xpose.msra.mxu0 %v1213
  %1238 = vmatprep.subr.mxu0 0.0
  %1239 = vmatpush1.xpose.msra.mxu0 %v1216
  %1240 = vmatprep.subr.mxu0 0.0
  %1241 = vmatpush1.xpose.msra.mxu0 %v1219
  %1242 = vmatprep.subr.mxu0 0.0
  %1243 = vmatpush1.xpose.msra.mxu0 %v1222
  %1244 = vmatprep.subr.mxu0 0.0
  %1245 = vmatpush1.xpose.msra.mxu0 %v1225
  %1246 = vmatprep.subr.mxu0 0.0
  %1247 = vmatpush1.xpose.msra.mxu0 %v1228
  %1248 = vmatprep.subr.mxu0 0.0
  %1249 = vmatpush1.xpose.msra.mxu0 %v1231
  %1250 = vmatprep.subr.mxu0 0.0
  %1251 = vmatpush1.xpose.msra.mxu0 %v1234
  %1252 = vmatprep.subr.mxu0 0.0
  %1253 = vmatpush1.xpose.msra.mxu0 0.0
  %1254 = vmatprep.subr.mxu0 0.0
  %1255 = vmatpush1.xpose.msra.mxu0 0.0
  %1256 = vmatprep.subr.mxu0 0.0
  %1257 = vmatpush1.xpose.msra.mxu0 0.0
  %1258 = vmatprep.subr.mxu0 0.0
  %1259 = vmatpush1.xpose.msra.mxu0 0.0
  %1260 = vmatprep.subr.mxu0 0.0
  %1261 = vmatpush1.xpose.msra.mxu0 0.0
  %1262 = vmatprep.subr.mxu0 0.0
  %1263 = vmatpush1.xpose.msra.mxu0 0.0
  %1264 = vmatprep.subr.mxu0 0.0
  %1265 = vmatpush1.xpose.msra.mxu0 0.0
  %1266 = vmatprep.subr.mxu0 0.0
  %1267 = vmatpush1.xpose.msra.mxu0 0.0
  %1268 = vmatprep.subr.mxu0 0.0
  %1269 = vmatpush1.xpose.msra.mxu0 0.0
  %1270 = vmatprep.subr.mxu0 0.0
  %1271 = vmatpush1.xpose.msra.mxu0 0.0
  %1272 = vmatprep.subr.mxu0 0.0
  %1273 = vmatpush1.xpose.msra.mxu0 0.0
  %1274 = vmatprep.subr.mxu0 0.0
  %1275 = vmatpush1.xpose.msra.mxu0 0.0
  %1276 = vmatprep.subr.mxu0 0.0
  %1277 = vmatpush1.xpose.msra.mxu0 0.0
  %1278 = vmatprep.subr.mxu0 0.0
  %1279 = vmatpush1.xpose.msra.mxu0 0.0
  %1280 = vmatprep.subr.mxu0 0.0
  %1281 = vmatpush1.xpose.msra.mxu0 0.0
  %1282 = vmatprep.subr.mxu0 0.0
  %1283 = vmatpush1.xpose.msra.mxu0 0.0
  %1284 = vmatprep.subr.mxu0 0.0
  %1285 = vmatpush1.xpose.msra.mxu0 0.0
  %1286 = vmatprep.subr.mxu0 0.0
  %1287 = vmatpush1.xpose.msra.mxu0 0.0
  %1288 = vmatprep.subr.mxu0 0.0
  %1289 = vmatpush1.xpose.msra.mxu0 0.0
  %1290 = vmatprep.subr.mxu0 0.0
  %1291 = vmatpush1.xpose.msra.mxu0 0.0
  %1292 = vmatprep.subr.mxu0 0.0
  %1293 = vmatpush1.xpose.msra.mxu0 0.0
  %1294 = vmatprep.subr.mxu0 0.0
  %1295 = vmatpush1.xpose.msra.mxu0 0.0
  %1296 = vmatprep.subr.mxu0 0.0
  %1297 = vmatpush1.xpose.msra.mxu0 0.0
  %1298 = vmatprep.subr.mxu0 0.0
  %1299 = vmatpush1.xpose.msra.mxu0 0.0
  %1300 = vmatprep.mubr.f32.mxu0 0.0
  %1301 = vmatmul.mubr.f32.gmra.mrb[0].mxu0 %v1210
  %v1302 = vpop.f32.mrb[0].mxu0
  %v1303 = vadd.f32 %v84, %v1302
  %v1304 = vpop.f32.mrb[0].mxu0
  %1305 = vdwg.mxu0
  %vm1306 = vcmask 519168
  %1307 = vst.msk [vmem:[%s5] sm:$0xf] %vm1306, %v1303
  %s1308 = scalar_lea.vmem %s3, 8
  %v1309 = vld [vmem:[%s1308] sm:$0xff]
  %1310 = vmatprep.subr.mxu0 0.0
  %1311 = vmatpush1.msra.mxu0 %v20
  %1312 = vmatprep.subr.mxu0 0.0
  %1313 = vmatpush1.msra.mxu0 %v21
  %1314 = vmatprep.subr.mxu0 0.0
  %1315 = vmatpush1.msra.mxu0 %v22
  %1316 = vmatprep.subr.mxu0 0.0
  %1317 = vmatpush1.msra.mxu0 %v23
  %1318 = vmatprep.subr.mxu0 0.0
  %1319 = vmatpush1.msra.mxu0 %v24
  %1320 = vmatprep.subr.mxu0 0.0
  %1321 = vmatpush1.msra.mxu0 %v25
  %1322 = vmatprep.subr.mxu0 0.0
  %1323 = vmatpush1.msra.mxu0 %v26
  %1324 = vmatprep.subr.mxu0 0.0
  %1325 = vmatpush1.msra.mxu0 %v27
  %1326 = vmatprep.subr.mxu0 0.0
  %1327 = vmatpush1.msra.mxu0 %v28
  %1328 = vmatprep.subr.mxu0 0.0
  %1329 = vmatpush1.msra.mxu0 %v29
  %1330 = vmatprep.subr.mxu0 0.0
  %1331 = vmatpush1.msra.mxu0 %v30
  %1332 = vmatprep.subr.mxu0 0.0
  %1333 = vmatpush1.msra.mxu0 %v31
  %1334 = vmatprep.subr.mxu0 0.0
  %1335 = vmatpush1.msra.mxu0 %v32
  %1336 = vmatprep.subr.mxu0 0.0
  %1337 = vmatpush1.msra.mxu0 %v33
  %1338 = vmatprep.subr.mxu0 0.0
  %1339 = vmatpush1.msra.mxu0 %v34
  %1340 = vmatprep.subr.mxu0 0.0
  %1341 = vmatpush1.msra.mxu0 %v35
  %1342 = vmatprep.subr.mxu0 0.0
  %1343 = vmatpush1.msra.mxu0 0.0
  %1344 = vmatprep.subr.mxu0 0.0
  %1345 = vmatpush1.msra.mxu0 0.0
  %1346 = vmatprep.subr.mxu0 0.0
  %1347 = vmatpush1.msra.mxu0 0.0
  %1348 = vmatprep.subr.mxu0 0.0
  %1349 = vmatpush1.msra.mxu0 0.0
  %1350 = vmatprep.subr.mxu0 0.0
  %1351 = vmatpush1.msra.mxu0 0.0
  %1352 = vmatprep.subr.mxu0 0.0
  %1353 = vmatpush1.msra.mxu0 0.0
  %1354 = vmatprep.subr.mxu0 0.0
  %1355 = vmatpush1.msra.mxu0 0.0
  %1356 = vmatprep.subr.mxu0 0.0
  %1357 = vmatpush1.msra.mxu0 0.0
  %1358 = vmatprep.subr.mxu0 0.0
  %1359 = vmatpush1.msra.mxu0 0.0
  %1360 = vmatprep.subr.mxu0 0.0
  %1361 = vmatpush1.msra.mxu0 0.0
  %1362 = vmatprep.subr.mxu0 0.0
  %1363 = vmatpush1.msra.mxu0 0.0
  %1364 = vmatprep.subr.mxu0 0.0
  %1365 = vmatpush1.msra.mxu0 0.0
  %1366 = vmatprep.subr.mxu0 0.0
  %1367 = vmatpush1.msra.mxu0 0.0
  %1368 = vmatprep.subr.mxu0 0.0
  %1369 = vmatpush1.msra.mxu0 0.0
  %1370 = vmatprep.subr.mxu0 0.0
  %1371 = vmatpush1.msra.mxu0 0.0
  %1372 = vmatprep.subr.mxu0 0.0
  %1373 = vmatpush1.msra.mxu0 0.0
  %1374 = vmatprep.mubr.f32.mxu0 0.0
  %1375 = vmatmul.mubr.f32.gmra.mrb[0].mxu0 %v1309
  %v1376 = vpop.f32.mrb[0].mxu0
  %v1377 = vadd.f32 %v36, %v1376
  %v1378 = vpop.f32.mrb[0].mxu0
  %1379 = vdwg.mxu0
  %v1380 = vsel %vm91, %v1377, 0.0
  %1381 = vadd.xlane.f32.xlu0 %v1380
  %v1382 = vpop.xlane.xlu0 %1381
  %v1383 = vmul.f32 %v1382, %v323
  %v1384 = vsub.f32 %v1377, %v1383
  %v1385 = vmul.f32 %v1384, %v1384
  %v1386 = vsel %vm91, %v1385, 0.0
  %1387 = vadd.xlane.f32.xlu0 %v1386
  %v1388 = vpop.xlane.xlu0 %1387
  %v1389 = vmul.f32 %v1388, %v323
  %v1390 = vadd.f32 %v1389, 1e-05
  %v1391 = vrsqrt.pop %v1390
  %v1392 = vmul.f32 %v1384, %v1391
  %v1393 = vmul.f32 %v1392, %v337
  %v1394 = vadd.f32 %v1393, %v342
  %s1395 = scalar_lea.vmem %s0, 64
  %v1396 = vld [vmem:[%s1395] sm:$0xff]
  %v1397 = vld [vmem:[%s1395 + $0x8] sm:$0xff]
  %v1398 = vld [vmem:[%s1395 + $0x10] sm:$0xff]
  %v1399 = vld [vmem:[%s1395 + $0x18] sm:$0xff]
  %v1400 = vld [vmem:[%s1395 + $0x20] sm:$0xff]
  %v1401 = vld [vmem:[%s1395 + $0x28] sm:$0xff]
  %v1402 = vld [vmem:[%s1395 + $0x30] sm:$0xff]
  %v1403 = vld [vmem:[%s1395 + $0x38] sm:$0xff]
  %v1405 = vsel %vm356, %v1396, 0
  %v1408 = vsel %vm356, %v1397, 0
  %v1411 = vsel %vm356, %v1398, 0
  %v1414 = vsel %vm356, %v1399, 0
  %v1417 = vsel %vm356, %v1400, 0
  %v1420 = vsel %vm356, %v1401, 0
  %v1423 = vsel %vm356, %v1402, 0
  %v1426 = vsel %vm356, %v1403, 0
  %1428 = vmatprep.subr.mxu0 0.0
  %1429 = vmatpush1.msra.mxu0 %v57
  %1430 = vmatprep.subr.mxu0 0.0
  %1431 = vmatpush1.msra.mxu0 0.0
  %1432 = vmatprep.subr.mxu0 0.0
  %1433 = vmatpush1.msra.mxu0 0.0
  %1434 = vmatprep.subr.mxu0 0.0
  %1435 = vmatpush1.msra.mxu0 0.0
  %1436 = vmatprep.subr.mxu0 0.0
  %1437 = vmatpush1.msra.mxu0 0.0
  %1438 = vmatprep.subr.mxu0 0.0
  %1439 = vmatpush1.msra.mxu0 0.0
  %1440 = vmatprep.subr.mxu0 0.0
  %1441 = vmatpush1.msra.mxu0 0.0
  %1442 = vmatprep.subr.mxu0 0.0
  %1443 = vmatpush1.msra.mxu0 0.0
  %1444 = vmatprep.subr.mxu0 0.0
  %1445 = vmatpush1.msra.mxu0 0.0
  %1446 = vmatprep.subr.mxu0 0.0
  %1447 = vmatpush1.msra.mxu0 0.0
  %1448 = vmatprep.subr.mxu0 0.0
  %1449 = vmatpush1.msra.mxu0 0.0
  %1450 = vmatprep.subr.mxu0 0.0
  %1451 = vmatpush1.msra.mxu0 0.0
  %1452 = vmatprep.subr.mxu0 0.0
  %1453 = vmatpush1.msra.mxu0 0.0
  %1454 = vmatprep.subr.mxu0 0.0
  %1455 = vmatpush1.msra.mxu0 0.0
  %1456 = vmatprep.subr.mxu0 0.0
  %1457 = vmatpush1.msra.mxu0 0.0
  %1458 = vmatprep.subr.mxu0 0.0
  %1459 = vmatpush1.msra.mxu0 0.0
  %1460 = vmatprep.subr.mxu0 0.0
  %1461 = vmatpush1.msra.mxu0 0.0
  %1462 = vmatprep.subr.mxu0 0.0
  %1463 = vmatpush1.msra.mxu0 0.0
  %1464 = vmatprep.subr.mxu0 0.0
  %1465 = vmatpush1.msra.mxu0 0.0
  %1466 = vmatprep.subr.mxu0 0.0
  %1467 = vmatpush1.msra.mxu0 0.0
  %1468 = vmatprep.subr.mxu0 0.0
  %1469 = vmatpush1.msra.mxu0 0.0
  %1470 = vmatprep.subr.mxu0 0.0
  %1471 = vmatpush1.msra.mxu0 0.0
  %1472 = vmatprep.subr.mxu0 0.0
  %1473 = vmatpush1.msra.mxu0 0.0
  %1474 = vmatprep.subr.mxu0 0.0
  %1475 = vmatpush1.msra.mxu0 0.0
  %1476 = vmatprep.subr.mxu0 0.0
  %1477 = vmatpush1.msra.mxu0 0.0
  %1478 = vmatprep.subr.mxu0 0.0
  %1479 = vmatpush1.msra.mxu0 0.0
  %1480 = vmatprep.subr.mxu0 0.0
  %1481 = vmatpush1.msra.mxu0 0.0
  %1482 = vmatprep.subr.mxu0 0.0
  %1483 = vmatpush1.msra.mxu0 0.0
  %1484 = vmatprep.subr.mxu0 0.0
  %1485 = vmatpush1.msra.mxu0 0.0
  %1486 = vmatprep.subr.mxu0 0.0
  %1487 = vmatpush1.msra.mxu0 0.0
  %1488 = vmatprep.subr.mxu0 0.0
  %1489 = vmatpush1.msra.mxu0 0.0
  %1490 = vmatprep.subr.mxu0 0.0
  %1491 = vmatpush1.msra.mxu0 0.0
  %1492 = vmatprep.mubr.f32.mxu0 0.0
  %1493 = vmatmul.mubr.f32.gmra.mrb[0].mxu0 %v1405
  %v1494 = vpop.f32.mrb[0].mxu0
  %v1495 = vadd.f32 %v355, %v1494
  %v1496 = vpop.f32.mrb[0].mxu0
  %1497 = vmatprep.mubr.f32.mxu0 0.0
  %1498 = vmatmul.mubr.f32.gmra.mrb[0].mxu0 %v1408
  %v1499 = vpop.f32.mrb[0].mxu0
  %v1500 = vadd.f32 %v355, %v1499
  %v1501 = vpop.f32.mrb[0].mxu0
  %1502 = vmatprep.mubr.f32.mxu0 0.0
  %1503 = vmatmul.mubr.f32.gmra.mrb[0].mxu0 %v1411
  %v1504 = vpop.f32.mrb[0].mxu0
  %v1505 = vadd.f32 %v355, %v1504
  %v1506 = vpop.f32.mrb[0].mxu0
  %1507 = vmatprep.mubr.f32.mxu0 0.0
  %1508 = vmatmul.mubr.f32.gmra.mrb[0].mxu0 %v1414
  %v1509 = vpop.f32.mrb[0].mxu0
  %v1510 = vadd.f32 %v355, %v1509
  %v1511 = vpop.f32.mrb[0].mxu0
  %1512 = vmatprep.mubr.f32.mxu0 0.0
  %1513 = vmatmul.mubr.f32.gmra.mrb[0].mxu0 %v1417
  %v1514 = vpop.f32.mrb[0].mxu0
  %v1515 = vadd.f32 %v355, %v1514
  %v1516 = vpop.f32.mrb[0].mxu0
  %1517 = vmatprep.mubr.f32.mxu0 0.0
  %1518 = vmatmul.mubr.f32.gmra.mrb[0].mxu0 %v1420
  %v1519 = vpop.f32.mrb[0].mxu0
  %v1520 = vadd.f32 %v355, %v1519
  %v1521 = vpop.f32.mrb[0].mxu0
  %1522 = vmatprep.mubr.f32.mxu0 0.0
  %1523 = vmatmul.mubr.f32.gmra.mrb[0].mxu0 %v1423
  %v1524 = vpop.f32.mrb[0].mxu0
  %v1525 = vadd.f32 %v355, %v1524
  %v1526 = vpop.f32.mrb[0].mxu0
  %1527 = vmatprep.mubr.f32.mxu0 0.0
  %1528 = vmatmul.mubr.f32.gmra.mrb[0].mxu0 %v1426
  %v1529 = vpop.f32.mrb[0].mxu0
  %v1530 = vadd.f32 %v355, %v1529
  %v1531 = vpop.f32.mrb[0].mxu0
  %1532 = vdwg.mxu0
  %v1533 = vlaneseq
  %v1534 = vshrl.u32 %v1533, 7
  %v1535 = vsub.s32 1, %v1534
  %v1536 = vrot.slane %v246, %v1535
  %v1537 = vadd.f32 %v1495, %v1536
  %v1538 = vadd.f32 %v1500, %v1536
  %v1539 = vadd.f32 %v1505, %v1536
  %v1540 = vadd.f32 %v1510, %v1536
  %v1541 = vadd.f32 %v1515, %v1536
  %v1542 = vadd.f32 %v1520, %v1536
  %v1543 = vadd.f32 %v1525, %v1536
  %v1544 = vadd.f32 %v1530, %v1536
  %s1545 = scalar_lea.vmem %s1, 8
  %v1546 = vld [vmem:[%s1545] sm:$0xff]
  %v1548 = vsel %vm91, %v1546, 0
  %v1551 = vsel %vm91, %v1394, 0
  %1553 = vmatprep.subr.mxu0 0.0
  %1554 = vmatpush1.msra.mxu0 %v67
  %1555 = vmatprep.subr.mxu0 0.0
  %1556 = vmatpush1.msra.mxu0 %v68
  %1557 = vmatprep.subr.mxu0 0.0
  %1558 = vmatpush1.msra.mxu0 %v69
  %1559 = vmatprep.subr.mxu0 0.0
  %1560 = vmatpush1.msra.mxu0 %v70
  %1561 = vmatprep.subr.mxu0 0.0
  %1562 = vmatpush1.msra.mxu0 %v71
  %1563 = vmatprep.subr.mxu0 0.0
  %1564 = vmatpush1.msra.mxu0 %v72
  %1565 = vmatprep.subr.mxu0 0.0
  %1566 = vmatpush1.msra.mxu0 %v73
  %1567 = vmatprep.subr.mxu0 0.0
  %1568 = vmatpush1.msra.mxu0 %v74
  %1569 = vmatprep.subr.mxu0 0.0
  %1570 = vmatpush1.msra.mxu0 0.0
  %1571 = vmatprep.subr.mxu0 0.0
  %1572 = vmatpush1.msra.mxu0 0.0
  %1573 = vmatprep.subr.mxu0 0.0
  %1574 = vmatpush1.msra.mxu0 0.0
  %1575 = vmatprep.subr.mxu0 0.0
  %1576 = vmatpush1.msra.mxu0 0.0
  %1577 = vmatprep.subr.mxu0 0.0
  %1578 = vmatpush1.msra.mxu0 0.0
  %1579 = vmatprep.subr.mxu0 0.0
  %1580 = vmatpush1.msra.mxu0 0.0
  %1581 = vmatprep.subr.mxu0 0.0
  %1582 = vmatpush1.msra.mxu0 0.0
  %1583 = vmatprep.subr.mxu0 0.0
  %1584 = vmatpush1.msra.mxu0 0.0
  %1585 = vmatprep.subr.mxu0 0.0
  %1586 = vmatpush1.msra.mxu0 0.0
  %1587 = vmatprep.subr.mxu0 0.0
  %1588 = vmatpush1.msra.mxu0 0.0
  %1589 = vmatprep.subr.mxu0 0.0
  %1590 = vmatpush1.msra.mxu0 0.0
  %1591 = vmatprep.subr.mxu0 0.0
  %1592 = vmatpush1.msra.mxu0 0.0
  %1593 = vmatprep.subr.mxu0 0.0
  %1594 = vmatpush1.msra.mxu0 0.0
  %1595 = vmatprep.subr.mxu0 0.0
  %1596 = vmatpush1.msra.mxu0 0.0
  %1597 = vmatprep.subr.mxu0 0.0
  %1598 = vmatpush1.msra.mxu0 0.0
  %1599 = vmatprep.subr.mxu0 0.0
  %1600 = vmatpush1.msra.mxu0 0.0
  %1601 = vmatprep.subr.mxu0 0.0
  %1602 = vmatpush1.msra.mxu0 0.0
  %1603 = vmatprep.subr.mxu0 0.0
  %1604 = vmatpush1.msra.mxu0 0.0
  %1605 = vmatprep.subr.mxu0 0.0
  %1606 = vmatpush1.msra.mxu0 0.0
  %1607 = vmatprep.subr.mxu0 0.0
  %1608 = vmatpush1.msra.mxu0 0.0
  %1609 = vmatprep.subr.mxu0 0.0
  %1610 = vmatpush1.msra.mxu0 0.0
  %1611 = vmatprep.subr.mxu0 0.0
  %1612 = vmatpush1.msra.mxu0 0.0
  %1613 = vmatprep.subr.mxu0 0.0
  %1614 = vmatpush1.msra.mxu0 0.0
  %1615 = vmatprep.subr.mxu0 0.0
  %1616 = vmatpush1.msra.mxu0 0.0
  %1617 = vmatprep.mubr.f32.mxu0 0.0
  %1618 = vmatmul.mubr.f32.gmra.mrb[0].mxu0 %v1548
  %v1619 = vpop.f32.mrb[0].mxu0
  %v1620 = vadd.f32 0.0, %v1619
  %v1621 = vpop.f32.mrb[0].mxu0
  %1622 = vmatprep.mubr.f32.mxu0 0.0
  %1623 = vmatmul.mubr.f32.gmra.mrb[0].mxu0 %v1551
  %v1624 = vpop.f32.mrb[0].mxu0
  %v1625 = vadd.f32 0.0, %v1624
  %v1626 = vpop.f32.mrb[0].mxu0
  %1627 = vdwg.mxu0
  %v1629 = vsel %vm91, %v1537, 0
  %v1632 = vsel %vm91, %v1538, 0
  %v1635 = vsel %vm91, %v1539, 0
  %v1638 = vsel %vm91, %v1540, 0
  %v1641 = vsel %vm91, %v1541, 0
  %v1644 = vsel %vm91, %v1542, 0
  %v1647 = vsel %vm91, %v1543, 0
  %v1650 = vsel %vm91, %v1544, 0
  %1652 = vmatprep.subr.mxu0 0.0
  %1653 = vmatpush1.msra.mxu0 %v59
  %1654 = vmatprep.subr.mxu0 0.0
  %1655 = vmatpush1.msra.mxu0 %v60
  %1656 = vmatprep.subr.mxu0 0.0
  %1657 = vmatpush1.msra.mxu0 %v61
  %1658 = vmatprep.subr.mxu0 0.0
  %1659 = vmatpush1.msra.mxu0 %v62
  %1660 = vmatprep.subr.mxu0 0.0
  %1661 = vmatpush1.msra.mxu0 %v63
  %1662 = vmatprep.subr.mxu0 0.0
  %1663 = vmatpush1.msra.mxu0 %v64
  %1664 = vmatprep.subr.mxu0 0.0
  %1665 = vmatpush1.msra.mxu0 %v65
  %1666 = vmatprep.subr.mxu0 0.0
  %1667 = vmatpush1.msra.mxu0 %v66
  %1668 = vmatprep.subr.mxu0 0.0
  %1669 = vmatpush1.msra.mxu0 0.0
  %1670 = vmatprep.subr.mxu0 0.0
  %1671 = vmatpush1.msra.mxu0 0.0
  %1672 = vmatprep.subr.mxu0 0.0
  %1673 = vmatpush1.msra.mxu0 0.0
  %1674 = vmatprep.subr.mxu0 0.0
  %1675 = vmatpush1.msra.mxu0 0.0
  %1676 = vmatprep.subr.mxu0 0.0
  %1677 = vmatpush1.msra.mxu0 0.0
  %1678 = vmatprep.subr.mxu0 0.0
  %1679 = vmatpush1.msra.mxu0 0.0
  %1680 = vmatprep.subr.mxu0 0.0
  %1681 = vmatpush1.msra.mxu0 0.0
  %1682 = vmatprep.subr.mxu0 0.0
  %1683 = vmatpush1.msra.mxu0 0.0
  %1684 = vmatprep.subr.mxu0 0.0
  %1685 = vmatpush1.msra.mxu0 0.0
  %1686 = vmatprep.subr.mxu0 0.0
  %1687 = vmatpush1.msra.mxu0 0.0
  %1688 = vmatprep.subr.mxu0 0.0
  %1689 = vmatpush1.msra.mxu0 0.0
  %1690 = vmatprep.subr.mxu0 0.0
  %1691 = vmatpush1.msra.mxu0 0.0
  %1692 = vmatprep.subr.mxu0 0.0
  %1693 = vmatpush1.msra.mxu0 0.0
  %1694 = vmatprep.subr.mxu0 0.0
  %1695 = vmatpush1.msra.mxu0 0.0
  %1696 = vmatprep.subr.mxu0 0.0
  %1697 = vmatpush1.msra.mxu0 0.0
  %1698 = vmatprep.subr.mxu0 0.0
  %1699 = vmatpush1.msra.mxu0 0.0
  %1700 = vmatprep.subr.mxu0 0.0
  %1701 = vmatpush1.msra.mxu0 0.0
  %1702 = vmatprep.subr.mxu0 0.0
  %1703 = vmatpush1.msra.mxu0 0.0
  %1704 = vmatprep.subr.mxu0 0.0
  %1705 = vmatpush1.msra.mxu0 0.0
  %1706 = vmatprep.subr.mxu0 0.0
  %1707 = vmatpush1.msra.mxu0 0.0
  %1708 = vmatprep.subr.mxu0 0.0
  %1709 = vmatpush1.msra.mxu0 0.0
  %1710 = vmatprep.subr.mxu0 0.0
  %1711 = vmatpush1.msra.mxu0 0.0
  %1712 = vmatprep.subr.mxu0 0.0
  %1713 = vmatpush1.msra.mxu0 0.0
  %1714 = vmatprep.subr.mxu0 0.0
  %1715 = vmatpush1.msra.mxu0 0.0
  %1716 = vmatprep.mubr.f32.mxu0 0.0
  %1717 = vmatmul.mubr.f32.gmra.mrb[0].mxu0 %v1629
  %v1718 = vpop.f32.mrb[0].mxu0
  %v1719 = vadd.f32 0.0, %v1718
  %v1720 = vpop.f32.mrb[0].mxu0
  %1721 = vmatprep.mubr.f32.mxu0 0.0
  %1722 = vmatmul.mubr.f32.gmra.mrb[0].mxu0 %v1632
  %v1723 = vpop.f32.mrb[0].mxu0
  %v1724 = vadd.f32 0.0, %v1723
  %v1725 = vpop.f32.mrb[0].mxu0
  %1726 = vmatprep.mubr.f32.mxu0 0.0
  %1727 = vmatmul.mubr.f32.gmra.mrb[0].mxu0 %v1635
  %v1728 = vpop.f32.mrb[0].mxu0
  %v1729 = vadd.f32 0.0, %v1728
  %v1730 = vpop.f32.mrb[0].mxu0
  %1731 = vmatprep.mubr.f32.mxu0 0.0
  %1732 = vmatmul.mubr.f32.gmra.mrb[0].mxu0 %v1638
  %v1733 = vpop.f32.mrb[0].mxu0
  %v1734 = vadd.f32 0.0, %v1733
  %v1735 = vpop.f32.mrb[0].mxu0
  %1736 = vmatprep.mubr.f32.mxu0 0.0
  %1737 = vmatmul.mubr.f32.gmra.mrb[0].mxu0 %v1641
  %v1738 = vpop.f32.mrb[0].mxu0
  %v1739 = vadd.f32 0.0, %v1738
  %v1740 = vpop.f32.mrb[0].mxu0
  %1741 = vmatprep.mubr.f32.mxu0 0.0
  %1742 = vmatmul.mubr.f32.gmra.mrb[0].mxu0 %v1644
  %v1743 = vpop.f32.mrb[0].mxu0
  %v1744 = vadd.f32 0.0, %v1743
  %v1745 = vpop.f32.mrb[0].mxu0
  %1746 = vmatprep.mubr.f32.mxu0 0.0
  %1747 = vmatmul.mubr.f32.gmra.mrb[0].mxu0 %v1647
  %v1748 = vpop.f32.mrb[0].mxu0
  %v1749 = vadd.f32 0.0, %v1748
  %v1750 = vpop.f32.mrb[0].mxu0
  %1751 = vmatprep.mubr.f32.mxu0 0.0
  %1752 = vmatmul.mubr.f32.gmra.mrb[0].mxu0 %v1650
  %v1753 = vpop.f32.mrb[0].mxu0
  %v1754 = vadd.f32 0.0, %v1753
  %v1755 = vpop.f32.mrb[0].mxu0
  %1756 = vdwg.mxu0
  %v1758 = vsel %vm91, %v1719, 0
  %v1761 = vsel %vm91, %v1724, 0
  %v1764 = vsel %vm91, %v1729, 0
  %v1767 = vsel %vm91, %v1734, 0
  %v1770 = vsel %vm91, %v1739, 0
  %v1773 = vsel %vm91, %v1744, 0
  %v1776 = vsel %vm91, %v1749, 0
  %v1779 = vsel %vm91, %v1754, 0
  %v1782 = vsel %vm91, %v1620, 0
  %v1785 = vsel %vm91, %v1625, 0
  %1787 = vmatprep.subr.mxu0 0.0
  %1788 = vmatpush1.xpose.msra.mxu0 %v1782
  %1789 = vmatprep.subr.mxu0 0.0
  %1790 = vmatpush1.xpose.msra.mxu0 %v1785
  %1791 = vmatprep.subr.mxu0 0.0
  %1792 = vmatpush1.xpose.msra.mxu0 0.0
  %1793 = vmatprep.subr.mxu0 0.0
  %1794 = vmatpush1.xpose.msra.mxu0 0.0
  %1795 = vmatprep.subr.mxu0 0.0
  %1796 = vmatpush1.xpose.msra.mxu0 0.0
  %1797 = vmatprep.subr.mxu0 0.0
  %1798 = vmatpush1.xpose.msra.mxu0 0.0
  %1799 = vmatprep.subr.mxu0 0.0
  %1800 = vmatpush1.xpose.msra.mxu0 0.0
  %1801 = vmatprep.subr.mxu0 0.0
  %1802 = vmatpush1.xpose.msra.mxu0 0.0
  %1803 = vmatprep.subr.mxu0 0.0
  %1804 = vmatpush1.xpose.msra.mxu0 0.0
  %1805 = vmatprep.subr.mxu0 0.0
  %1806 = vmatpush1.xpose.msra.mxu0 0.0
  %1807 = vmatprep.subr.mxu0 0.0
  %1808 = vmatpush1.xpose.msra.mxu0 0.0
  %1809 = vmatprep.subr.mxu0 0.0
  %1810 = vmatpush1.xpose.msra.mxu0 0.0
  %1811 = vmatprep.subr.mxu0 0.0
  %1812 = vmatpush1.xpose.msra.mxu0 0.0
  %1813 = vmatprep.subr.mxu0 0.0
  %1814 = vmatpush1.xpose.msra.mxu0 0.0
  %1815 = vmatprep.subr.mxu0 0.0
  %1816 = vmatpush1.xpose.msra.mxu0 0.0
  %1817 = vmatprep.subr.mxu0 0.0
  %1818 = vmatpush1.xpose.msra.mxu0 0.0
  %1819 = vmatprep.subr.mxu0 0.0
  %1820 = vmatpush1.xpose.msra.mxu0 0.0
  %1821 = vmatprep.subr.mxu0 0.0
  %1822 = vmatpush1.xpose.msra.mxu0 0.0
  %1823 = vmatprep.subr.mxu0 0.0
  %1824 = vmatpush1.xpose.msra.mxu0 0.0
  %1825 = vmatprep.subr.mxu0 0.0
  %1826 = vmatpush1.xpose.msra.mxu0 0.0
  %1827 = vmatprep.subr.mxu0 0.0
  %1828 = vmatpush1.xpose.msra.mxu0 0.0
  %1829 = vmatprep.subr.mxu0 0.0
  %1830 = vmatpush1.xpose.msra.mxu0 0.0
  %1831 = vmatprep.subr.mxu0 0.0
  %1832 = vmatpush1.xpose.msra.mxu0 0.0
  %1833 = vmatprep.subr.mxu0 0.0
  %1834 = vmatpush1.xpose.msra.mxu0 0.0
  %1835 = vmatprep.subr.mxu0 0.0
  %1836 = vmatpush1.xpose.msra.mxu0 0.0
  %1837 = vmatprep.subr.mxu0 0.0
  %1838 = vmatpush1.xpose.msra.mxu0 0.0
  %1839 = vmatprep.subr.mxu0 0.0
  %1840 = vmatpush1.xpose.msra.mxu0 0.0
  %1841 = vmatprep.subr.mxu0 0.0
  %1842 = vmatpush1.xpose.msra.mxu0 0.0
  %1843 = vmatprep.subr.mxu0 0.0
  %1844 = vmatpush1.xpose.msra.mxu0 0.0
  %1845 = vmatprep.subr.mxu0 0.0
  %1846 = vmatpush1.xpose.msra.mxu0 0.0
  %1847 = vmatprep.subr.mxu0 0.0
  %1848 = vmatpush1.xpose.msra.mxu0 0.0
  %1849 = vmatprep.subr.mxu0 0.0
  %1850 = vmatpush1.xpose.msra.mxu0 0.0
  %1851 = vmatprep.mubr.f32.mxu0 0.0
  %1852 = vmatmul.mubr.f32.gmra.mrb[0].mxu0 %v1758
  %v1853 = vpop.f32.mrb[0].mxu0
  %v1854 = vadd.f32 %v712, %v1853
  %v1855 = vpop.f32.mrb[0].mxu0
  %1856 = vmatprep.mubr.f32.mxu0 0.0
  %1857 = vmatmul.mubr.f32.gmra.mrb[0].mxu0 %v1761
  %v1858 = vpop.f32.mrb[0].mxu0
  %v1859 = vadd.f32 %v712, %v1858
  %v1860 = vpop.f32.mrb[0].mxu0
  %1861 = vmatprep.mubr.f32.mxu0 0.0
  %1862 = vmatmul.mubr.f32.gmra.mrb[0].mxu0 %v1764
  %v1863 = vpop.f32.mrb[0].mxu0
  %v1864 = vadd.f32 %v712, %v1863
  %v1865 = vpop.f32.mrb[0].mxu0
  %1866 = vmatprep.mubr.f32.mxu0 0.0
  %1867 = vmatmul.mubr.f32.gmra.mrb[0].mxu0 %v1767
  %v1868 = vpop.f32.mrb[0].mxu0
  %v1869 = vadd.f32 %v712, %v1868
  %v1870 = vpop.f32.mrb[0].mxu0
  %1871 = vmatprep.mubr.f32.mxu0 0.0
  %1872 = vmatmul.mubr.f32.gmra.mrb[0].mxu0 %v1770
  %v1873 = vpop.f32.mrb[0].mxu0
  %v1874 = vadd.f32 %v712, %v1873
  %v1875 = vpop.f32.mrb[0].mxu0
  %1876 = vmatprep.mubr.f32.mxu0 0.0
  %1877 = vmatmul.mubr.f32.gmra.mrb[0].mxu0 %v1773
  %v1878 = vpop.f32.mrb[0].mxu0
  %v1879 = vadd.f32 %v712, %v1878
  %v1880 = vpop.f32.mrb[0].mxu0
  %1881 = vmatprep.mubr.f32.mxu0 0.0
  %1882 = vmatmul.mubr.f32.gmra.mrb[0].mxu0 %v1776
  %v1883 = vpop.f32.mrb[0].mxu0
  %v1884 = vadd.f32 %v712, %v1883
  %v1885 = vpop.f32.mrb[0].mxu0
  %1886 = vmatprep.mubr.f32.mxu0 0.0
  %1887 = vmatmul.mubr.f32.gmra.mrb[0].mxu0 %v1779
  %v1888 = vpop.f32.mrb[0].mxu0
  %v1889 = vadd.f32 %v712, %v1888
  %v1890 = vpop.f32.mrb[0].mxu0
  %1891 = vdwg.mxu0
  %v1892 = vsel %vm848, %v1854, -inf
  %1893 = vmax.xlane.f32.xlu0 %v1892
  %v1894 = vpop.xlane.xlu0 %1893
  %v1895 = vsel %vm848, %v1859, -inf
  %1896 = vmax.xlane.f32.xlu0 %v1895
  %v1897 = vpop.xlane.xlu0 %1896
  %v1898 = vsel %vm848, %v1864, -inf
  %1899 = vmax.xlane.f32.xlu0 %v1898
  %v1900 = vpop.xlane.xlu0 %1899
  %v1901 = vsel %vm848, %v1869, -inf
  %1902 = vmax.xlane.f32.xlu0 %v1901
  %v1903 = vpop.xlane.xlu0 %1902
  %v1904 = vsel %vm848, %v1874, -inf
  %1905 = vmax.xlane.f32.xlu0 %v1904
  %v1906 = vpop.xlane.xlu0 %1905
  %v1907 = vsel %vm848, %v1879, -inf
  %1908 = vmax.xlane.f32.xlu0 %v1907
  %v1909 = vpop.xlane.xlu0 %1908
  %v1910 = vsel %vm848, %v1884, -inf
  %1911 = vmax.xlane.f32.xlu0 %v1910
  %v1912 = vpop.xlane.xlu0 %1911
  %v1913 = vsel %vm848, %v1889, -inf
  %1914 = vmax.xlane.f32.xlu0 %v1913
  %v1915 = vpop.xlane.xlu0 %1914
  %v1916 = vsub.f32 %v1854, %v1894
  %v1917 = vsub.f32 %v1859, %v1897
  %v1918 = vsub.f32 %v1864, %v1900
  %v1919 = vsub.f32 %v1869, %v1903
  %v1920 = vsub.f32 %v1874, %v1906
  %v1921 = vsub.f32 %v1879, %v1909
  %v1922 = vsub.f32 %v1884, %v1912
  %v1923 = vsub.f32 %v1889, %v1915
  %v1924 = vmul.f32 %v1916, 1.442695
  %v1925 = vpow.pop %v1924
  %v1926 = vmul.f32 %v1917, 1.442695
  %v1927 = vpow.pop %v1926
  %v1928 = vmul.f32 %v1918, 1.442695
  %v1929 = vpow.pop %v1928
  %v1930 = vmul.f32 %v1919, 1.442695
  %v1931 = vpow.pop %v1930
  %v1932 = vmul.f32 %v1920, 1.442695
  %v1933 = vpow.pop %v1932
  %v1934 = vmul.f32 %v1921, 1.442695
  %v1935 = vpow.pop %v1934
  %v1936 = vmul.f32 %v1922, 1.442695
  %v1937 = vpow.pop %v1936
  %v1938 = vmul.f32 %v1923, 1.442695
  %v1939 = vpow.pop %v1938
  %v1940 = vsel %vm848, %v1925, 0.0
  %1941 = vadd.xlane.f32.xlu0 %v1940
  %v1942 = vpop.xlane.xlu0 %1941
  %v1943 = vsel %vm848, %v1927, 0.0
  %1944 = vadd.xlane.f32.xlu0 %v1943
  %v1945 = vpop.xlane.xlu0 %1944
  %v1946 = vsel %vm848, %v1929, 0.0
  %1947 = vadd.xlane.f32.xlu0 %v1946
  %v1948 = vpop.xlane.xlu0 %1947
  %v1949 = vsel %vm848, %v1931, 0.0
  %1950 = vadd.xlane.f32.xlu0 %v1949
  %v1951 = vpop.xlane.xlu0 %1950
  %v1952 = vsel %vm848, %v1933, 0.0
  %1953 = vadd.xlane.f32.xlu0 %v1952
  %v1954 = vpop.xlane.xlu0 %1953
  %v1955 = vsel %vm848, %v1935, 0.0
  %1956 = vadd.xlane.f32.xlu0 %v1955
  %v1957 = vpop.xlane.xlu0 %1956
  %v1958 = vsel %vm848, %v1937, 0.0
  %1959 = vadd.xlane.f32.xlu0 %v1958
  %v1960 = vpop.xlane.xlu0 %1959
  %v1961 = vsel %vm848, %v1939, 0.0
  %1962 = vadd.xlane.f32.xlu0 %v1961
  %v1963 = vpop.xlane.xlu0 %1962
  %v1964 = vrcp.pop %v1942
  %v1965 = vmul.f32 %v1925, %v1964
  %v1966 = vrcp.pop %v1945
  %v1967 = vmul.f32 %v1927, %v1966
  %v1968 = vrcp.pop %v1948
  %v1969 = vmul.f32 %v1929, %v1968
  %v1970 = vrcp.pop %v1951
  %v1971 = vmul.f32 %v1931, %v1970
  %v1972 = vrcp.pop %v1954
  %v1973 = vmul.f32 %v1933, %v1972
  %v1974 = vrcp.pop %v1957
  %v1975 = vmul.f32 %v1935, %v1974
  %v1976 = vrcp.pop %v1960
  %v1977 = vmul.f32 %v1937, %v1976
  %v1978 = vrcp.pop %v1963
  %v1979 = vmul.f32 %v1939, %v1978
  %1980 = vrot.lane.b32.xlu0 %v1620, 64
  %v1981 = vpop.permute.xlu0 %1980
  %1982 = vrot.lane.b32.xlu0 %v1625, 64
  %v1983 = vpop.permute.xlu0 %1982
  %v1987 = vsel %vm848, %v1965, 0
  %v1990 = vsel %vm848, %v1967, 0
  %v1993 = vsel %vm848, %v1969, 0
  %v1996 = vsel %vm848, %v1971, 0
  %v1999 = vsel %vm848, %v1973, 0
  %v2002 = vsel %vm848, %v1975, 0
  %v2005 = vsel %vm848, %v1977, 0
  %v2008 = vsel %vm848, %v1979, 0
  %2010 = vmatprep.subr.mxu0 0.0
  %2011 = vmatpush1.msra.mxu0 %v1981
  %2012 = vmatprep.subr.mxu0 0.0
  %2013 = vmatpush1.msra.mxu0 %v1983
  %2014 = vmatprep.subr.mxu0 0.0
  %2015 = vmatpush1.msra.mxu0 0.0
  %2016 = vmatprep.subr.mxu0 0.0
  %2017 = vmatpush1.msra.mxu0 0.0
  %2018 = vmatprep.subr.mxu0 0.0
  %2019 = vmatpush1.msra.mxu0 0.0
  %2020 = vmatprep.subr.mxu0 0.0
  %2021 = vmatpush1.msra.mxu0 0.0
  %2022 = vmatprep.subr.mxu0 0.0
  %2023 = vmatpush1.msra.mxu0 0.0
  %2024 = vmatprep.subr.mxu0 0.0
  %2025 = vmatpush1.msra.mxu0 0.0
  %2026 = vmatprep.subr.mxu0 0.0
  %2027 = vmatpush1.msra.mxu0 0.0
  %2028 = vmatprep.subr.mxu0 0.0
  %2029 = vmatpush1.msra.mxu0 0.0
  %2030 = vmatprep.subr.mxu0 0.0
  %2031 = vmatpush1.msra.mxu0 0.0
  %2032 = vmatprep.subr.mxu0 0.0
  %2033 = vmatpush1.msra.mxu0 0.0
  %2034 = vmatprep.subr.mxu0 0.0
  %2035 = vmatpush1.msra.mxu0 0.0
  %2036 = vmatprep.subr.mxu0 0.0
  %2037 = vmatpush1.msra.mxu0 0.0
  %2038 = vmatprep.subr.mxu0 0.0
  %2039 = vmatpush1.msra.mxu0 0.0
  %2040 = vmatprep.subr.mxu0 0.0
  %2041 = vmatpush1.msra.mxu0 0.0
  %2042 = vmatprep.subr.mxu0 0.0
  %2043 = vmatpush1.msra.mxu0 0.0
  %2044 = vmatprep.subr.mxu0 0.0
  %2045 = vmatpush1.msra.mxu0 0.0
  %2046 = vmatprep.subr.mxu0 0.0
  %2047 = vmatpush1.msra.mxu0 0.0
  %2048 = vmatprep.subr.mxu0 0.0
  %2049 = vmatpush1.msra.mxu0 0.0
  %2050 = vmatprep.subr.mxu0 0.0
  %2051 = vmatpush1.msra.mxu0 0.0
  %2052 = vmatprep.subr.mxu0 0.0
  %2053 = vmatpush1.msra.mxu0 0.0
  %2054 = vmatprep.subr.mxu0 0.0
  %2055 = vmatpush1.msra.mxu0 0.0
  %2056 = vmatprep.subr.mxu0 0.0
  %2057 = vmatpush1.msra.mxu0 0.0
  %2058 = vmatprep.subr.mxu0 0.0
  %2059 = vmatpush1.msra.mxu0 0.0
  %2060 = vmatprep.subr.mxu0 0.0
  %2061 = vmatpush1.msra.mxu0 0.0
  %2062 = vmatprep.subr.mxu0 0.0
  %2063 = vmatpush1.msra.mxu0 0.0
  %2064 = vmatprep.subr.mxu0 0.0
  %2065 = vmatpush1.msra.mxu0 0.0
  %2066 = vmatprep.subr.mxu0 0.0
  %2067 = vmatpush1.msra.mxu0 0.0
  %2068 = vmatprep.subr.mxu0 0.0
  %2069 = vmatpush1.msra.mxu0 0.0
  %2070 = vmatprep.subr.mxu0 0.0
  %2071 = vmatpush1.msra.mxu0 0.0
  %2072 = vmatprep.subr.mxu0 0.0
  %2073 = vmatpush1.msra.mxu0 0.0
  %2074 = vmatprep.mubr.f32.mxu0 0.0
  %2075 = vmatmul.mubr.f32.gmra.mrb[0].mxu0 %v1987
  %v2076 = vpop.f32.mrb[0].mxu0
  %v2077 = vadd.f32 0.0, %v2076
  %v2078 = vpop.f32.mrb[0].mxu0
  %2079 = vmatprep.mubr.f32.mxu0 0.0
  %2080 = vmatmul.mubr.f32.gmra.mrb[0].mxu0 %v1990
  %v2081 = vpop.f32.mrb[0].mxu0
  %v2082 = vadd.f32 0.0, %v2081
  %v2083 = vpop.f32.mrb[0].mxu0
  %2084 = vmatprep.mubr.f32.mxu0 0.0
  %2085 = vmatmul.mubr.f32.gmra.mrb[0].mxu0 %v1993
  %v2086 = vpop.f32.mrb[0].mxu0
  %v2087 = vadd.f32 0.0, %v2086
  %v2088 = vpop.f32.mrb[0].mxu0
  %2089 = vmatprep.mubr.f32.mxu0 0.0
  %2090 = vmatmul.mubr.f32.gmra.mrb[0].mxu0 %v1996
  %v2091 = vpop.f32.mrb[0].mxu0
  %v2092 = vadd.f32 0.0, %v2091
  %v2093 = vpop.f32.mrb[0].mxu0
  %2094 = vmatprep.mubr.f32.mxu0 0.0
  %2095 = vmatmul.mubr.f32.gmra.mrb[0].mxu0 %v1999
  %v2096 = vpop.f32.mrb[0].mxu0
  %v2097 = vadd.f32 0.0, %v2096
  %v2098 = vpop.f32.mrb[0].mxu0
  %2099 = vmatprep.mubr.f32.mxu0 0.0
  %2100 = vmatmul.mubr.f32.gmra.mrb[0].mxu0 %v2002
  %v2101 = vpop.f32.mrb[0].mxu0
  %v2102 = vadd.f32 0.0, %v2101
  %v2103 = vpop.f32.mrb[0].mxu0
  %2104 = vmatprep.mubr.f32.mxu0 0.0
  %2105 = vmatmul.mubr.f32.gmra.mrb[0].mxu0 %v2005
  %v2106 = vpop.f32.mrb[0].mxu0
  %v2107 = vadd.f32 0.0, %v2106
  %v2108 = vpop.f32.mrb[0].mxu0
  %2109 = vmatprep.mubr.f32.mxu0 0.0
  %2110 = vmatmul.mubr.f32.gmra.mrb[0].mxu0 %v2008
  %v2111 = vpop.f32.mrb[0].mxu0
  %v2112 = vadd.f32 0.0, %v2111
  %v2113 = vpop.f32.mrb[0].mxu0
  %2114 = vdwg.mxu0
  %v2116 = vsel %vm91, %v2077, 0
  %v2119 = vsel %vm91, %v2082, 0
  %v2122 = vsel %vm91, %v2087, 0
  %v2125 = vsel %vm91, %v2092, 0
  %v2128 = vsel %vm91, %v2097, 0
  %v2131 = vsel %vm91, %v2102, 0
  %v2134 = vsel %vm91, %v2107, 0
  %v2137 = vsel %vm91, %v2112, 0
  %2139 = vmatprep.subr.mxu0 0.0
  %2140 = vmatpush1.msra.mxu0 %v75
  %2141 = vmatprep.subr.mxu0 0.0
  %2142 = vmatpush1.msra.mxu0 %v76
  %2143 = vmatprep.subr.mxu0 0.0
  %2144 = vmatpush1.msra.mxu0 %v77
  %2145 = vmatprep.subr.mxu0 0.0
  %2146 = vmatpush1.msra.mxu0 %v78
  %2147 = vmatprep.subr.mxu0 0.0
  %2148 = vmatpush1.msra.mxu0 %v79
  %2149 = vmatprep.subr.mxu0 0.0
  %2150 = vmatpush1.msra.mxu0 %v80
  %2151 = vmatprep.subr.mxu0 0.0
  %2152 = vmatpush1.msra.mxu0 %v81
  %2153 = vmatprep.subr.mxu0 0.0
  %2154 = vmatpush1.msra.mxu0 %v82
  %2155 = vmatprep.subr.mxu0 0.0
  %2156 = vmatpush1.msra.mxu0 0.0
  %2157 = vmatprep.subr.mxu0 0.0
  %2158 = vmatpush1.msra.mxu0 0.0
  %2159 = vmatprep.subr.mxu0 0.0
  %2160 = vmatpush1.msra.mxu0 0.0
  %2161 = vmatprep.subr.mxu0 0.0
  %2162 = vmatpush1.msra.mxu0 0.0
  %2163 = vmatprep.subr.mxu0 0.0
  %2164 = vmatpush1.msra.mxu0 0.0
  %2165 = vmatprep.subr.mxu0 0.0
  %2166 = vmatpush1.msra.mxu0 0.0
  %2167 = vmatprep.subr.mxu0 0.0
  %2168 = vmatpush1.msra.mxu0 0.0
  %2169 = vmatprep.subr.mxu0 0.0
  %2170 = vmatpush1.msra.mxu0 0.0
  %2171 = vmatprep.subr.mxu0 0.0
  %2172 = vmatpush1.msra.mxu0 0.0
  %2173 = vmatprep.subr.mxu0 0.0
  %2174 = vmatpush1.msra.mxu0 0.0
  %2175 = vmatprep.subr.mxu0 0.0
  %2176 = vmatpush1.msra.mxu0 0.0
  %2177 = vmatprep.subr.mxu0 0.0
  %2178 = vmatpush1.msra.mxu0 0.0
  %2179 = vmatprep.subr.mxu0 0.0
  %2180 = vmatpush1.msra.mxu0 0.0
  %2181 = vmatprep.subr.mxu0 0.0
  %2182 = vmatpush1.msra.mxu0 0.0
  %2183 = vmatprep.subr.mxu0 0.0
  %2184 = vmatpush1.msra.mxu0 0.0
  %2185 = vmatprep.subr.mxu0 0.0
  %2186 = vmatpush1.msra.mxu0 0.0
  %2187 = vmatprep.subr.mxu0 0.0
  %2188 = vmatpush1.msra.mxu0 0.0
  %2189 = vmatprep.subr.mxu0 0.0
  %2190 = vmatpush1.msra.mxu0 0.0
  %2191 = vmatprep.subr.mxu0 0.0
  %2192 = vmatpush1.msra.mxu0 0.0
  %2193 = vmatprep.subr.mxu0 0.0
  %2194 = vmatpush1.msra.mxu0 0.0
  %2195 = vmatprep.subr.mxu0 0.0
  %2196 = vmatpush1.msra.mxu0 0.0
  %2197 = vmatprep.subr.mxu0 0.0
  %2198 = vmatpush1.msra.mxu0 0.0
  %2199 = vmatprep.subr.mxu0 0.0
  %2200 = vmatpush1.msra.mxu0 0.0
  %2201 = vmatprep.subr.mxu0 0.0
  %2202 = vmatpush1.msra.mxu0 0.0
  %2203 = vmatprep.mubr.f32.mxu0 0.0
  %2204 = vmatmul.mubr.f32.gmra.mrb[0].mxu0 %v2116
  %v2205 = vpop.f32.mrb[0].mxu0
  %v2206 = vadd.f32 0.0, %v2205
  %v2207 = vpop.f32.mrb[0].mxu0
  %2208 = vmatprep.mubr.f32.mxu0 0.0
  %2209 = vmatmul.mubr.f32.gmra.mrb[0].mxu0 %v2119
  %v2210 = vpop.f32.mrb[0].mxu0
  %v2211 = vadd.f32 0.0, %v2210
  %v2212 = vpop.f32.mrb[0].mxu0
  %2213 = vmatprep.mubr.f32.mxu0 0.0
  %2214 = vmatmul.mubr.f32.gmra.mrb[0].mxu0 %v2122
  %v2215 = vpop.f32.mrb[0].mxu0
  %v2216 = vadd.f32 0.0, %v2215
  %v2217 = vpop.f32.mrb[0].mxu0
  %2218 = vmatprep.mubr.f32.mxu0 0.0
  %2219 = vmatmul.mubr.f32.gmra.mrb[0].mxu0 %v2125
  %v2220 = vpop.f32.mrb[0].mxu0
  %v2221 = vadd.f32 0.0, %v2220
  %v2222 = vpop.f32.mrb[0].mxu0
  %2223 = vmatprep.mubr.f32.mxu0 0.0
  %2224 = vmatmul.mubr.f32.gmra.mrb[0].mxu0 %v2128
  %v2225 = vpop.f32.mrb[0].mxu0
  %v2226 = vadd.f32 0.0, %v2225
  %v2227 = vpop.f32.mrb[0].mxu0
  %2228 = vmatprep.mubr.f32.mxu0 0.0
  %2229 = vmatmul.mubr.f32.gmra.mrb[0].mxu0 %v2131
  %v2230 = vpop.f32.mrb[0].mxu0
  %v2231 = vadd.f32 0.0, %v2230
  %v2232 = vpop.f32.mrb[0].mxu0
  %2233 = vmatprep.mubr.f32.mxu0 0.0
  %2234 = vmatmul.mubr.f32.gmra.mrb[0].mxu0 %v2134
  %v2235 = vpop.f32.mrb[0].mxu0
  %v2236 = vadd.f32 0.0, %v2235
  %v2237 = vpop.f32.mrb[0].mxu0
  %2238 = vmatprep.mubr.f32.mxu0 0.0
  %2239 = vmatmul.mubr.f32.gmra.mrb[0].mxu0 %v2137
  %v2240 = vpop.f32.mrb[0].mxu0
  %v2241 = vadd.f32 0.0, %v2240
  %v2242 = vpop.f32.mrb[0].mxu0
  %2243 = vdwg.mxu0
  %v2244 = vadd.f32 %v1537, %v2206
  %v2245 = vadd.f32 %v1538, %v2211
  %v2246 = vadd.f32 %v1539, %v2216
  %v2247 = vadd.f32 %v1540, %v2221
  %v2248 = vadd.f32 %v1541, %v2226
  %v2249 = vadd.f32 %v1542, %v2231
  %v2250 = vadd.f32 %v1543, %v2236
  %v2251 = vadd.f32 %v1544, %v2241
  %v2253 = vsel %vm91, %v2244, 0
  %v2256 = vsel %vm91, %v2245, 0
  %v2259 = vsel %vm91, %v2246, 0
  %v2262 = vsel %vm91, %v2247, 0
  %v2265 = vsel %vm91, %v2248, 0
  %v2268 = vsel %vm91, %v2249, 0
  %v2271 = vsel %vm91, %v2250, 0
  %v2274 = vsel %vm91, %v2251, 0
  %2276 = vmatprep.subr.mxu0 0.0
  %2277 = vmatpush1.xpose.msra.mxu0 %v2253
  %2278 = vmatprep.subr.mxu0 0.0
  %2279 = vmatpush1.xpose.msra.mxu0 %v2256
  %2280 = vmatprep.subr.mxu0 0.0
  %2281 = vmatpush1.xpose.msra.mxu0 %v2259
  %2282 = vmatprep.subr.mxu0 0.0
  %2283 = vmatpush1.xpose.msra.mxu0 %v2262
  %2284 = vmatprep.subr.mxu0 0.0
  %2285 = vmatpush1.xpose.msra.mxu0 %v2265
  %2286 = vmatprep.subr.mxu0 0.0
  %2287 = vmatpush1.xpose.msra.mxu0 %v2268
  %2288 = vmatprep.subr.mxu0 0.0
  %2289 = vmatpush1.xpose.msra.mxu0 %v2271
  %2290 = vmatprep.subr.mxu0 0.0
  %2291 = vmatpush1.xpose.msra.mxu0 %v2274
  %2292 = vmatprep.subr.mxu0 0.0
  %2293 = vmatpush1.xpose.msra.mxu0 0.0
  %2294 = vmatprep.subr.mxu0 0.0
  %2295 = vmatpush1.xpose.msra.mxu0 0.0
  %2296 = vmatprep.subr.mxu0 0.0
  %2297 = vmatpush1.xpose.msra.mxu0 0.0
  %2298 = vmatprep.subr.mxu0 0.0
  %2299 = vmatpush1.xpose.msra.mxu0 0.0
  %2300 = vmatprep.subr.mxu0 0.0
  %2301 = vmatpush1.xpose.msra.mxu0 0.0
  %2302 = vmatprep.subr.mxu0 0.0
  %2303 = vmatpush1.xpose.msra.mxu0 0.0
  %2304 = vmatprep.subr.mxu0 0.0
  %2305 = vmatpush1.xpose.msra.mxu0 0.0
  %2306 = vmatprep.subr.mxu0 0.0
  %2307 = vmatpush1.xpose.msra.mxu0 0.0
  %2308 = vmatprep.subr.mxu0 0.0
  %2309 = vmatpush1.xpose.msra.mxu0 0.0
  %2310 = vmatprep.subr.mxu0 0.0
  %2311 = vmatpush1.xpose.msra.mxu0 0.0
  %2312 = vmatprep.subr.mxu0 0.0
  %2313 = vmatpush1.xpose.msra.mxu0 0.0
  %2314 = vmatprep.subr.mxu0 0.0
  %2315 = vmatpush1.xpose.msra.mxu0 0.0
  %2316 = vmatprep.subr.mxu0 0.0
  %2317 = vmatpush1.xpose.msra.mxu0 0.0
  %2318 = vmatprep.subr.mxu0 0.0
  %2319 = vmatpush1.xpose.msra.mxu0 0.0
  %2320 = vmatprep.subr.mxu0 0.0
  %2321 = vmatpush1.xpose.msra.mxu0 0.0
  %2322 = vmatprep.subr.mxu0 0.0
  %2323 = vmatpush1.xpose.msra.mxu0 0.0
  %2324 = vmatprep.subr.mxu0 0.0
  %2325 = vmatpush1.xpose.msra.mxu0 0.0
  %2326 = vmatprep.subr.mxu0 0.0
  %2327 = vmatpush1.xpose.msra.mxu0 0.0
  %2328 = vmatprep.subr.mxu0 0.0
  %2329 = vmatpush1.xpose.msra.mxu0 0.0
  %2330 = vmatprep.subr.mxu0 0.0
  %2331 = vmatpush1.xpose.msra.mxu0 0.0
  %2332 = vmatprep.subr.mxu0 0.0
  %2333 = vmatpush1.xpose.msra.mxu0 0.0
  %2334 = vmatprep.subr.mxu0 0.0
  %2335 = vmatpush1.xpose.msra.mxu0 0.0
  %2336 = vmatprep.subr.mxu0 0.0
  %2337 = vmatpush1.xpose.msra.mxu0 0.0
  %2338 = vmatprep.subr.mxu0 0.0
  %2339 = vmatpush1.xpose.msra.mxu0 0.0
  %2340 = vmatprep.mubr.f32.mxu0 0.0
  %2341 = vmatmul.mubr.f32.gmra.mrb[0].mxu0 %v1210
  %v2342 = vpop.f32.mrb[0].mxu0
  %v2343 = vadd.f32 %v84, %v2342
  %v2344 = vpop.f32.mrb[0].mxu0
  %2345 = vdwg.mxu0
  %s2346 = scalar_lea.vmem %s5, 4
  %2347 = vst.msk [vmem:[%s2346] sm:$0xf] %vm1306, %v2343
  // Predicated region
  $region22: #{my_ip_adapter_forward.1} parent=0 // pred_check
    _
  $region23: #{my_ip_adapter_forward.1} parent=0 // pred_check_branch
    %2349 = sbr.rel (0) target = $region25
  $region24: #{my_ip_adapter_forward.1} parent=0 // pred_region
    _
  $region25: #{my_ip_adapter_forward.1} parent=0 // pred_fallthru
    _
  // Predicated region
  $region26: #{my_ip_adapter_forward.1} parent=0 // pred_check
    _
  $region27: #{my_ip_adapter_forward.1} parent=0 // pred_check_branch
    %2351 = sbr.rel (0) target = $region29
  $region28: #{my_ip_adapter_forward.1} parent=0 // pred_region
    _
  $region29: #{my_ip_adapter_forward.1} parent=0 // pred_fallthru
    _

</llo_original>
